<compile_context>
chip_gen: v5e
topology: v5e:2x2
jax: 0.10.0
libtpu: 0.0.40
codegen_flags: <defaults>
</compile_context>

<pallas_src>
import functools

import jax
import jax.numpy as jnp
from jax.experimental import pallas as pl
from jax.experimental.pallas import tpu as pltpu

_LANE = 128  # vreg lane width


def _round_up(v, m):
    return (v + m - 1) // m * m


def _pad2d(arr, rows, cols):
    """Zero-pad a 2-D array up to (rows, cols)."""
    out = jnp.zeros((rows, cols), arr.dtype)
    return out.at[: arr.shape[0], : arr.shape[1]].set(arr)


def _l2_normalize(v):
    # F.normalize(v, p=2, dim=-1) == v / max(||v||_2, 1e-12); rsqrt -> EUP slot.
    return v * jax.lax.rsqrt(
        jnp.maximum(jnp.sum(v * v, axis=-1, keepdims=True), 1e-24)
    )


def _gcn_fused_kernel(
    a_ref, x_ref, w1l_ref, w1r_ref, b1_ref, w2l_ref, w2r_ref, b2_ref,
    out_ref, h_ref
):
    """Two-phase fused SAGEConv x2.

    grid = (2, n_row_tiles); phase axis is OUTER (sequential), so all of
    layer 1 is written to the h scratch before layer 2 reads it.
      phase 0: rows [i*TM, (i+1)*TM) of layer 1 -> h scratch (stays in VMEM)
      phase 1: rows [i*TM, (i+1)*TM) of layer 2 -> out
    """
    phase = pl.program_id(0)
    i = pl.program_id(1)
    tm = a_ref.shape[0]
    row0 = pl.multiple_of(i * tm, tm)

    @pl.when(phase == 0)
    def _():
        a = a_ref[...]                                   # (TM, N_p) mxu dtype
        agg = jnp.dot(a, x_ref[...], preferred_element_type=jnp.float32)
        x_rows = x_ref[pl.ds(row0, tm), :]               # (TM, Cin)
        h = (
            jnp.dot(agg.astype(w1l_ref.dtype), w1l_ref[...],
                    preferred_element_type=jnp.float32)
            + jnp.dot(x_rows, w1r_ref[...], preferred_element_type=jnp.float32)
            + b1_ref[...]
        )
        h = jnp.maximum(_l2_normalize(h), 0.0)           # normalize + relu (f32)
        # dropout(p=0.1) is identity in eval mode.
        h_ref[pl.ds(row0, tm), :] = h.astype(h_ref.dtype)
        # Deterministic placeholder; overwritten with the real result in phase 1.
        out_ref[...] = jnp.zeros(out_ref.shape, out_ref.dtype)

    @pl.when(phase == 1)
    def _():
        a = a_ref[...]                                   # (TM, N_p)
        agg = jnp.dot(a, h_ref[...], preferred_element_type=jnp.float32)
        h_rows = h_ref[pl.ds(row0, tm), :]               # (TM, H)
        out = (
            jnp.dot(agg.astype(w2l_ref.dtype), w2l_ref[...],
                    preferred_element_type=jnp.float32)
            + jnp.dot(h_rows, w2r_ref[...], preferred_element_type=jnp.float32)
            + b2_ref[...]
        )
        out_ref[...] = _l2_normalize(out).astype(out_ref.dtype)


def gcn_fused(a, x, w1l, w1r, b1, w2l, w2r, b2, *, tm):
    """Row-tiled, two-phase fused call. A row tiles are pipelined; x / weights /
    biases are resident (constant block index); h lives in a persistent VMEM
    scratch so it never round-trips through HBM."""
    n_p = a.shape[0]
    c_in = x.shape[1]
    hidden = w1l.shape[1]
    c_out = w2l.shape[1]
    n_tiles = n_p // tm
    mxu_dtype = a.dtype
    itm = jnp.dtype(mxu_dtype).itemsize

    def resident(shape):
        return pl.BlockSpec(shape, lambda p, i: (0, 0))

    # Rough VMEM budget (double-buffered A row tile + resident operands +
    # persistent h scratch), with 2x headroom, capped at v7x's 64 MiB physical.
    vmem_est = (
        2 * tm * n_p * itm            # A row tile (double-buffered)
        + 2 * n_p * c_in * itm        # resident x
        + n_p * hidden * itm          # h scratch
        + 2 * tm * c_out * 4          # out tile
        + 4 * (c_in * hidden * 2 + hidden * c_out * 2 + hidden + c_out) * 4
    )
    vmem_limit = int(min(max(2 * vmem_est, 32 * 1024 * 1024), 64 * 1024 * 1024))

    flops = 2 * (
        n_p * n_p * (c_in + hidden)          # A @ x, A @ h
        + 2 * n_p * c_in * hidden            # lin_l / lin_r layer 1
        + 2 * n_p * hidden * c_out           # lin_l / lin_r layer 2
    )
    bytes_accessed = (
        2 * n_p * n_p * itm                  # A read once per phase
        + n_p * c_in * itm
        + n_p * c_out * 4
        + 2 * (c_in * hidden * 2 + hidden * c_out * 2 + hidden + c_out) * itm
    )
    cost = pl.CostEstimate(
        flops=int(flops),
        transcendentals=int(2 * n_p),        # one rsqrt per row per layer
        bytes_accessed=int(bytes_accessed),
    )

    return pl.pallas_call(
        _gcn_fused_kernel,
        out_shape=jax.ShapeDtypeStruct((n_p, c_out), jnp.float32),
        grid=(2, n_tiles),
        in_specs=[
            pl.BlockSpec((tm, n_p), lambda p, i: (i, 0)),   # A row tile (pipelined)
            resident(x.shape),
            resident(w1l.shape), resident(w1r.shape), resident(b1.shape),
            resident(w2l.shape), resident(w2r.shape), resident(b2.shape),
        ],
        out_specs=pl.BlockSpec((tm, c_out), lambda p, i: (i, 0)),
        scratch_shapes=[pltpu.VMEM((n_p, hidden), mxu_dtype)],   # persistent h
        compiler_params=pltpu.CompilerParams(
            dimension_semantics=("arbitrary", "arbitrary"),
            vmem_limit_bytes=vmem_limit,
        ),
        cost_estimate=cost,
    )(a, x, w1l, w1r, b1, w2l, w2r, b2)


def build_mean_agg_matrix(edge_index, num_nodes):
    """Dense mean-aggregation matrix: A[dst, src] = 1/deg(dst) per edge src->dst."""
    src = edge_index[0]
    dst = edge_index[1]
    adj = jnp.zeros((num_nodes, num_nodes), jnp.float32)
    adj = adj.at[dst, src].add(1.0)
    deg = jnp.sum(adj, axis=1, keepdims=True)
    return adj / jnp.maximum(deg, 1.0)  # isolated nodes aggregate to 0


def init_linear(key, c_in, c_out, with_bias):
    """Deterministic Kaiming-uniform style init; weight stored as (in, out)."""
    kw, kb = jax.random.split(key)
    bound = 1.0 / jnp.sqrt(jnp.float32(c_in))
    w = jax.random.uniform(kw, (c_in, c_out), jnp.float32, -bound, bound)
    if with_bias:
        b = jax.random.uniform(kb, (1, c_out), jnp.float32, -bound, bound)
    else:
        b = jnp.zeros((1, c_out), jnp.float32)
    return w, b


def gcn_forward(x, edge_index, params, *, mxu_dtype=jnp.bfloat16, tile_m=512):
    """Full forward: build A, pad N to the row tile, run the fused kernel.

    mxu_dtype: dtype fed to the MXU for A / x / h / weights (bf16 halves the
    dominant HBM traffic; f32 reproduces the reference to ~1e-3).
    """
    n, c_in = x.shape
    c_out = params["w2_l"].shape[1]

    # Row tile: >= 128 (lane/sublane friendly), up to tile_m rows per step.
    tm = min(tile_m, _round_up(n, _LANE))
    n_p = _round_up(n, tm)

    a = build_mean_agg_matrix(edge_index, n)

    # Only N is padded (padded A rows/cols are zero -> they never contribute
    # and padded output rows are sliced off).  Channel dims stay natural size.
    a_p = _pad2d(a, n_p, n_p).astype(mxu_dtype)
    x_p = _pad2d(x, n_p, c_in).astype(mxu_dtype)
    w1l = params["w1_l"].astype(mxu_dtype)
    w1r = params["w1_r"].astype(mxu_dtype)
    w2l = params["w2_l"].astype(mxu_dtype)
    w2r = params["w2_r"].astype(mxu_dtype)
    b1 = params["b1_l"].astype(jnp.float32)   # biases / elementwise stay f32
    b2 = params["b2_l"].astype(jnp.float32)

    out_p = gcn_fused(a_p, x_p, w1l, w1r, b1, w2l, w2r, b2, tm=tm)
    return out_p[:n, :c_out]


def _gcn_reference(x, edge_index, params):
    """Pure-JAX reference with f32 HIGHEST-precision matmuls (same semantics)."""
    n = x.shape[0]
    a = build_mean_agg_matrix(edge_index, n)
    hp = jax.lax.Precision.HIGHEST

    def layer(a, x, wl, wr, b):
        agg = jnp.dot(a, x, precision=hp)
        out = jnp.dot(agg, wl, precision=hp) + b + jnp.dot(x, wr, precision=hp)
        norm = jnp.sqrt(jnp.sum(out * out, axis=-1, keepdims=True))
        return out / jnp.maximum(norm, 1e-12)

    h = jnp.maximum(layer(a, x, params["w1_l"], params["w1_r"], params["b1_l"]), 0.0)
    return layer(a, h, params["w2_l"], params["w2_r"], params["b2_l"])


if __name__ == "__main__":
    key = jax.random.PRNGKey(0)
    k_x, k_e, k1l, k1r, k2l, k2r = jax.random.split(key, 6)

    num_nodes = 16
    in_channel = 4
    hidden_channel = 32
    out_channel = 8
    num_edges = 48

    # deterministic inputs
    x = jax.random.normal(k_x, (num_nodes, in_channel), jnp.float32)
    edge_index = jax.random.randint(k_e, (2, num_edges), 0, num_nodes, jnp.int32)

    # deterministic parameters (SAGEConv: lin_l has bias, lin_r has no bias)
    w1_l, b1_l = init_linear(k1l, in_channel, hidden_channel, with_bias=True)
    w1_r, _ = init_linear(k1r, in_channel, hidden_channel, with_bias=False)
    w2_l, b2_l = init_linear(k2l, hidden_channel, out_channel, with_bias=True)
    w2_r, _ = init_linear(k2r, hidden_channel, out_channel, with_bias=False)

    params = dict(
        w1_l=w1_l, w1_r=w1_r, b1_l=b1_l,
        w2_l=w2_l, w2_r=w2_r, b2_l=b2_l,
    )

    ref = _gcn_reference(x, edge_index, params)

    # f32 mode: exact-semantics check at tight tolerance.
    fwd_f32 = jax.jit(functools.partial(gcn_forward, mxu_dtype=jnp.float32))
    out_f32 = fwd_f32(x, edge_index, params)
    jax.block_until_ready(out_f32)
    assert out_f32.shape == (num_nodes, out_channel), out_f32.shape
    assert bool(jnp.all(jnp.isfinite(out_f32)))
    err_f32 = float(jnp.max(jnp.abs(out_f32 - ref)))
    assert bool(jnp.allclose(out_f32, ref, rtol=2e-3, atol=2e-3)), err_f32

    # bf16-MXU mode (default / fast path): looser tolerance since A's 1/deg
    # entries and x/h are rounded to bf16 before the MXU (f32 accumulation).
    fwd_bf16 = jax.jit(functools.partial(gcn_forward, mxu_dtype=jnp.bfloat16))
    out_bf16 = fwd_bf16(x, edge_index, params)
    jax.block_until_ready(out_bf16)
    assert out_bf16.shape == (num_nodes, out_channel), out_bf16.shape
    assert bool(jnp.all(jnp.isfinite(out_bf16)))
    err_bf16 = float(jnp.max(jnp.abs(out_bf16 - ref)))
    assert bool(jnp.allclose(out_bf16, ref, rtol=5e-2, atol=5e-2)), err_bf16

    print("KERNEL_OK")
</pallas_src>

<mosaic_0001>
module attributes {stable_mosaic.version = 11 : i64} {
  func.func @_gcn_fused_kernel(%arg0: i32, %arg1: i32, %arg2: memref<128x128xf32, #tpu.memory_space<vmem>>, %arg3: memref<128x4xf32, #tpu.memory_space<vmem>>, %arg4: memref<4x32xf32, #tpu.memory_space<vmem>>, %arg5: memref<4x32xf32, #tpu.memory_space<vmem>>, %arg6: memref<1x32xf32, #tpu.memory_space<vmem>>, %arg7: memref<32x8xf32, #tpu.memory_space<vmem>>, %arg8: memref<32x8xf32, #tpu.memory_space<vmem>>, %arg9: memref<1x8xf32, #tpu.memory_space<vmem>>, %arg10: memref<128x8xf32, #tpu.memory_space<vmem>>, %arg11: memref<128x32xf32, #tpu.memory_space<vmem>>) attributes {dimension_semantics = [#tpu.dimension_semantics<arbitrary>, #tpu.dimension_semantics<arbitrary>], iteration_bounds = array<i64: 2, 1>, scalar_prefetch = 0 : i64, scratch_operands = 1 : i64, tpu.core_type = #tpu.core_type<tc>, window_params = [{transform_indices = @transform_0, window_bounds = array<i64: 128, 128>}, {pipeline_mode = #tpu.pipeline_mode<synchronous>, transform_indices = @transform_1, window_bounds = array<i64: 128, 4>}, {pipeline_mode = #tpu.pipeline_mode<synchronous>, transform_indices = @transform_2, window_bounds = array<i64: 4, 32>}, {pipeline_mode = #tpu.pipeline_mode<synchronous>, transform_indices = @transform_3, window_bounds = array<i64: 4, 32>}, {pipeline_mode = #tpu.pipeline_mode<synchronous>, transform_indices = @transform_4, window_bounds = array<i64: 1, 32>}, {pipeline_mode = #tpu.pipeline_mode<synchronous>, transform_indices = @transform_5, window_bounds = array<i64: 32, 8>}, {pipeline_mode = #tpu.pipeline_mode<synchronous>, transform_indices = @transform_6, window_bounds = array<i64: 32, 8>}, {pipeline_mode = #tpu.pipeline_mode<synchronous>, transform_indices = @transform_7, window_bounds = array<i64: 1, 8>}, {transform_indices = @transform_8, window_bounds = array<i64: 128, 8>}]} {
    %c128_i32 = arith.constant 128 : i32
    %0 = arith.muli %arg1, %c128_i32 : i32
    %1 = tpu.assume_multiple %0, 128 : i32
    %c0_i32 = arith.constant 0 : i32
    %2 = arith.cmpi eq, %arg0, %c0_i32 : i32
    %3 = arith.extui %2 : i1 to i32
    %c0_i32_0 = arith.constant 0 : i32
    %4 = arith.cmpi ne, %3, %c0_i32_0 : i32
    scf.if %4 {
      %c0 = arith.constant 0 : index
      %c0_2 = arith.constant 0 : index
      %8 = vector.load %arg2[%c0, %c0_2] : memref<128x128xf32, #tpu.memory_space<vmem>>, vector<128x128xf32>
      %c0_3 = arith.constant 0 : index
      %c0_4 = arith.constant 0 : index
      %9 = vector.load %arg3[%c0_3, %c0_4] : memref<128x4xf32, #tpu.memory_space<vmem>>, vector<128x4xf32>
      %cst = arith.constant dense<0.000000e+00> : vector<128x4xf32>
      %10 = tpu.matmul %8, %9, %cst {dimension_numbers = #tpu.dot_dimension_numbers<[1], [0], [0], [1], [0, 0, 1, 1], [], []>} : vector<128x128xf32>, vector<128x4xf32>, vector<128x4xf32> -> vector<128x4xf32>
      %11 = arith.index_cast %1 : i32 to index
      %c0_5 = arith.constant 0 : index
      %12 = vector.load %arg3[%11, %c0_5] : memref<128x4xf32, #tpu.memory_space<vmem>>, vector<128x4xf32>
      %c0_6 = arith.constant 0 : index
      %c0_7 = arith.constant 0 : index
      %13 = vector.load %arg4[%c0_6, %c0_7] : memref<4x32xf32, #tpu.memory_space<vmem>>, vector<4x32xf32>
      %cst_8 = arith.constant dense<0.000000e+00> : vector<128x32xf32>
      %14 = tpu.matmul %10, %13, %cst_8 {dimension_numbers = #tpu.dot_dimension_numbers<[1], [0], [0], [1], [0, 0, 1, 1], [], []>} : vector<128x4xf32>, vector<4x32xf32>, vector<128x32xf32> -> vector<128x32xf32>
      %c0_9 = arith.constant 0 : index
      %c0_10 = arith.constant 0 : index
      %15 = vector.load %arg5[%c0_9, %c0_10] : memref<4x32xf32, #tpu.memory_space<vmem>>, vector<4x32xf32>
      %cst_11 = arith.constant dense<0.000000e+00> : vector<128x32xf32>
      %16 = tpu.matmul %12, %15, %cst_11 {dimension_numbers = #tpu.dot_dimension_numbers<[1], [0], [0], [1], [0, 0, 1, 1], [], []>} : vector<128x4xf32>, vector<4x32xf32>, vector<128x32xf32> -> vector<128x32xf32>
      %17 = arith.addf %14, %16 : vector<128x32xf32>
      %c0_12 = arith.constant 0 : index
      %c0_13 = arith.constant 0 : index
      %18 = vector.load %arg6[%c0_12, %c0_13] : memref<1x32xf32, #tpu.memory_space<vmem>>, vector<1x32xf32>
      %19 = vector.broadcast %18 : vector<1x32xf32> to vector<128x32xf32>
      %20 = arith.addf %17, %19 : vector<128x32xf32>
      %21 = arith.mulf %20, %20 : vector<128x32xf32>
      %cst_14 = arith.constant dense<0.000000e+00> : vector<128xf32>
      %22 = vector.multi_reduction <add>, %21, %cst_14 [1] : vector<128x32xf32> to vector<128xf32>
      %23 = vector.shape_cast %22 : vector<128xf32> to vector<128x1xf32>
      %cst_15 = arith.constant 1.000000e-24 : f32
      %24 = vector.broadcast %cst_15 : f32 to vector<128x1xf32>
      %25 = arith.maximumf %23, %24 : vector<128x1xf32>
      %26 = math.rsqrt %25 : vector<128x1xf32>
      %27 = vector.broadcast %26 : vector<128x1xf32> to vector<128x32xf32>
      %28 = arith.mulf %20, %27 : vector<128x32xf32>
      %cst_16 = arith.constant 0.000000e+00 : f32
      %29 = vector.broadcast %cst_16 : f32 to vector<128x32xf32>
      %30 = arith.maximumf %28, %29 : vector<128x32xf32>
      %31 = arith.index_cast %1 : i32 to index
      %c0_17 = arith.constant 0 : index
      %32 = vector.load %arg11[%31, %c0_17] : memref<128x32xf32, #tpu.memory_space<vmem>>, vector<128x32xf32>
      tpu.vector_store %arg11[%31, %c0_17], %30 {strides = array<i32>} : memref<128x32xf32, #tpu.memory_space<vmem>>, vector<128x32xf32>,
      %cst_18 = arith.constant 0.000000e+00 : f32
      %33 = vector.broadcast %cst_18 : f32 to vector<128x8xf32>
      %c0_19 = arith.constant 0 : index
      %c0_20 = arith.constant 0 : index
      %34 = vector.load %arg10[%c0_19, %c0_20] : memref<128x8xf32, #tpu.memory_space<vmem>>, vector<128x8xf32>
      tpu.vector_store %arg10[%c0_19, %c0_20], %33 {strides = array<i32>} : memref<128x8xf32, #tpu.memory_space<vmem>>, vector<128x8xf32>,
    } else {
    }
    %c1_i32 = arith.constant 1 : i32
    %5 = arith.cmpi eq, %arg0, %c1_i32 : i32
    %6 = arith.extui %5 : i1 to i32
    %c0_i32_1 = arith.constant 0 : i32
    %7 = arith.cmpi ne, %6, %c0_i32_1 : i32
    scf.if %7 {
      %c0 = arith.constant 0 : index
      %c0_2 = arith.constant 0 : index
      %8 = vector.load %arg2[%c0, %c0_2] : memref<128x128xf32, #tpu.memory_space<vmem>>, vector<128x128xf32>
      %c0_3 = arith.constant 0 : index
      %c0_4 = arith.constant 0 : index
      %9 = vector.load %arg11[%c0_3, %c0_4] : memref<128x32xf32, #tpu.memory_space<vmem>>, vector<128x32xf32>
      %cst = arith.constant dense<0.000000e+00> : vector<128x32xf32>
      %10 = tpu.matmul %8, %9, %cst {dimension_numbers = #tpu.dot_dimension_numbers<[1], [0], [0], [1], [0, 0, 1, 1], [], []>} : vector<128x128xf32>, vector<128x32xf32>, vector<128x32xf32> -> vector<128x32xf32>
      %11 = arith.index_cast %1 : i32 to index
      %c0_5 = arith.constant 0 : index
      %12 = vector.load %arg11[%11, %c0_5] : memref<128x32xf32, #tpu.memory_space<vmem>>, vector<128x32xf32>
      %c0_6 = arith.constant 0 : index
      %c0_7 = arith.constant 0 : index
      %13 = vector.load %arg7[%c0_6, %c0_7] : memref<32x8xf32, #tpu.memory_space<vmem>>, vector<32x8xf32>
      %cst_8 = arith.constant dense<0.000000e+00> : vector<128x8xf32>
      %14 = tpu.matmul %10, %13, %cst_8 {dimension_numbers = #tpu.dot_dimension_numbers<[1], [0], [0], [1], [0, 0, 1, 1], [], []>} : vector<128x32xf32>, vector<32x8xf32>, vector<128x8xf32> -> vector<128x8xf32>
      %c0_9 = arith.constant 0 : index
      %c0_10 = arith.constant 0 : index
      %15 = vector.load %arg8[%c0_9, %c0_10] : memref<32x8xf32, #tpu.memory_space<vmem>>, vector<32x8xf32>
      %cst_11 = arith.constant dense<0.000000e+00> : vector<128x8xf32>
      %16 = tpu.matmul %12, %15, %cst_11 {dimension_numbers = #tpu.dot_dimension_numbers<[1], [0], [0], [1], [0, 0, 1, 1], [], []>} : vector<128x32xf32>, vector<32x8xf32>, vector<128x8xf32> -> vector<128x8xf32>
      %17 = arith.addf %14, %16 : vector<128x8xf32>
      %c0_12 = arith.constant 0 : index
      %c0_13 = arith.constant 0 : index
      %18 = vector.load %arg9[%c0_12, %c0_13] : memref<1x8xf32, #tpu.memory_space<vmem>>, vector<1x8xf32>
      %19 = vector.broadcast %18 : vector<1x8xf32> to vector<128x8xf32>
      %20 = arith.addf %17, %19 : vector<128x8xf32>
      %21 = arith.mulf %20, %20 : vector<128x8xf32>
      %cst_14 = arith.constant dense<0.000000e+00> : vector<128xf32>
      %22 = vector.multi_reduction <add>, %21, %cst_14 [1] : vector<128x8xf32> to vector<128xf32>
      %23 = vector.shape_cast %22 : vector<128xf32> to vector<128x1xf32>
      %cst_15 = arith.constant 1.000000e-24 : f32
      %24 = vector.broadcast %cst_15 : f32 to vector<128x1xf32>
      %25 = arith.maximumf %23, %24 : vector<128x1xf32>
      %26 = math.rsqrt %25 : vector<128x1xf32>
      %27 = vector.broadcast %26 : vector<128x1xf32> to vector<128x8xf32>
      %28 = arith.mulf %20, %27 : vector<128x8xf32>
      %c0_16 = arith.constant 0 : index
      %c0_17 = arith.constant 0 : index
      %29 = vector.load %arg10[%c0_16, %c0_17] : memref<128x8xf32, #tpu.memory_space<vmem>>, vector<128x8xf32>
      tpu.vector_store %arg10[%c0_16, %c0_17], %28 {strides = array<i32>} : memref<128x8xf32, #tpu.memory_space<vmem>>, vector<128x8xf32>,
    } else {
    }
    return
  }
  func.func @transform_0(%arg0: i32, %arg1: i32) -> (i32, i32) {
    %c0_i32 = arith.constant 0 : i32
    %c0_i32_0 = arith.constant 0 : i32
    return %arg1, %c0_i32 : i32, i32
  }
  func.func @transform_1(%arg0: i32, %arg1: i32) -> (i32, i32) {
    %c0_i32 = arith.constant 0 : i32
    %c0_i32_0 = arith.constant 0 : i32
    %c0_i32_1 = arith.constant 0 : i32
    return %c0_i32, %c0_i32_0 : i32, i32
  }
  func.func @transform_2(%arg0: i32, %arg1: i32) -> (i32, i32) {
    %c0_i32 = arith.constant 0 : i32
    %c0_i32_0 = arith.constant 0 : i32
    %c0_i32_1 = arith.constant 0 : i32
    return %c0_i32, %c0_i32_0 : i32, i32
  }
  func.func @transform_3(%arg0: i32, %arg1: i32) -> (i32, i32) {
    %c0_i32 = arith.constant 0 : i32
    %c0_i32_0 = arith.constant 0 : i32
    %c0_i32_1 = arith.constant 0 : i32
    return %c0_i32, %c0_i32_0 : i32, i32
  }
  func.func @transform_4(%arg0: i32, %arg1: i32) -> (i32, i32) {
    %c0_i32 = arith.constant 0 : i32
    %c0_i32_0 = arith.constant 0 : i32
    %c0_i32_1 = arith.constant 0 : i32
    return %c0_i32, %c0_i32_0 : i32, i32
  }
  func.func @transform_5(%arg0: i32, %arg1: i32) -> (i32, i32) {
    %c0_i32 = arith.constant 0 : i32
    %c0_i32_0 = arith.constant 0 : i32
    %c0_i32_1 = arith.constant 0 : i32
    return %c0_i32, %c0_i32_0 : i32, i32
  }
  func.func @transform_6(%arg0: i32, %arg1: i32) -> (i32, i32) {
    %c0_i32 = arith.constant 0 : i32
    %c0_i32_0 = arith.constant 0 : i32
    %c0_i32_1 = arith.constant 0 : i32
    return %c0_i32, %c0_i32_0 : i32, i32
  }
  func.func @transform_7(%arg0: i32, %arg1: i32) -> (i32, i32) {
    %c0_i32 = arith.constant 0 : i32
    %c0_i32_0 = arith.constant 0 : i32
    %c0_i32_1 = arith.constant 0 : i32
    return %c0_i32, %c0_i32_0 : i32, i32
  }
  func.func @transform_8(%arg0: i32, %arg1: i32) -> (i32, i32) {
    %c0_i32 = arith.constant 0 : i32
    %c0_i32_0 = arith.constant 0 : i32
    return %arg1, %c0_i32 : i32, i32
  }
}

</mosaic_0001>

<llo_original>
// kernel: gcn_forward.1
$region0: #{gcn_forward.1}
  #allocation0 [shape = 'u32[]', space=smem, size = 0x4, offset = 0x4, fixed_abs, tag = 'smem constant byte address 0x4 - core index']
  #allocation1 [shape = 'u32[72,128]{1,0:T(1,128)}', space=vmem, size = 0x9000, scoped, tag = 'internal scratch']
  #allocation2 [shape = 'f32[128,32]{1,0:T(8,128)}', space=vmem, size = 0x10000, scoped, tag = 'scratch operand']
  %s0 = inlined_call_operand.vmem [shape: f32[128,128], index: 0, kind: input, shape index: {}]
  %s1 = inlined_call_operand.vmem [shape: f32[128,4], index: 1, kind: input, shape index: {}]
  %s2 = inlined_call_operand.vmem [shape: f32[4,32], index: 2, kind: input, shape index: {}]
  %s3 = inlined_call_operand.vmem [shape: f32[4,32], index: 3, kind: input, shape index: {}]
  %s4 = inlined_call_operand.vmem [shape: f32[1,32], index: 4, kind: input, shape index: {}]
  %s5 = inlined_call_operand.vmem [shape: f32[32,8], index: 5, kind: input, shape index: {}]
  %s6 = inlined_call_operand.vmem [shape: f32[32,8], index: 6, kind: input, shape index: {}]
  %s7 = inlined_call_operand.vmem [shape: f32[1,8], index: 7, kind: input, shape index: {}]
  %s8 = inlined_call_operand.vmem [shape: f32[128,8], index: 8, kind: output, shape index: {}]
  %s9 = sld [smem:[#allocation0]]
  $region73: #{gcn_forward.1} parent=0
    _
  %s11 = ssub.s32 1, %s9
  %s12 = scalar_select 0, %s11, %s9
  loop: start=0, step=1, limit=4
  $region2: #{gcn_forward.1} parent=0 // loop_pre_header
    _
  $region3: #{gcn_forward.1} parent=0 // loop_header
    %s14 = sphi 0, %s18
    %p15 = scmp.ge.s32.totalorder %s14, 4
    %s21 = sphi 0, %s33
    %s22 = sphi 0, %s29
    %s23 = sphi 0, %s21
    %s24 = sphi 0, %s22
    %s25 = sphi 0, %s23
    %s26 = sphi 0, %s24
    %s36 = sphi 0, %s38
    %s39 = sphi 0, %s36
    %s40 = sphi 0, %s39
    %s56 = sphi 0, %s40
    %s60 = sphi 0, %s60
    %s62 = sphi 0, %s60
    %s63 = sphi 0, %s62
    %s77 = sphi 0, %s63
    %s81 = sphi 0, %s81
    %s83 = sphi 0, %s81
    %s84 = sphi 0, %s83
    %s98 = sphi 0, %s84
    %s102 = sphi 0, %s102
    %s104 = sphi 0, %s102
    %s105 = sphi 0, %s104
    %s119 = sphi 0, %s105
    %s123 = sphi 0, %s123
    %s125 = sphi 0, %s123
    %s126 = sphi 0, %s125
    %s140 = sphi 0, %s126
    %s144 = sphi 0, %s144
    %s146 = sphi 0, %s144
    %s147 = sphi 0, %s146
    %s161 = sphi 0, %s147
    %s165 = sphi 0, %s165
    %s167 = sphi 0, %s165
    %s168 = sphi 0, %s167
    %s182 = sphi 0, %s168
    %s186 = sphi 0, %s186
    %s188 = sphi 0, %s186
    %s189 = sphi 0, %s188
    %s203 = sphi 0, %s189
    %s209 = sphi 0, %s211
    %s212 = sphi 0, %s209
    %s213 = sphi 0, %s212
    %s229 = sphi 0, %s213
  $region4: #{gcn_forward.1} parent=0 // loop_header_branch
    %17 = sbr.rel (%p15) target = $region8
  $region5: #{gcn_forward.1} parent=0 // loop_body
    %s19 = ssub.s32 %s14, 1
    %s20 = ssub.s32 %s14, 2
    %s27 = sadd.s32 1, %s22
    %p28 = scmp.ge.s32.totalorder %s27, 1
    %s29 = scalar_select %p28, 0, %s27
    %s30 = sadd.s32 1, %s21
    %s31 = scalar_select %p28, %s30, %s21
    %p32 = scmp.ge.s32.totalorder %s31, 2
    %s33 = scalar_select %p32, 0, %s31
    %s34 = ssub.s32 %s22, %s29
    %p35 = scmp.eq.s32.totalorder %s34, 0
    %s37 = sadd.s32 %s36, 1
    %s38 = scalar_select %p35, %s36, %s37
    %p41 = pneg %p35
    %p42 = scmp.eq.s32.totalorder %s14, 1
    %p43 = por %p41, %p42
    %p44 = scmp.ne.s32.totalorder %s36, %s39
    %p45 = scmp.eq.s32.totalorder %s14, 0
    %p46 = por %p44, %p45
    %p47 = scmp.ne.s32.totalorder %s36, %s39
    %p48 = scmp.eq.s32.totalorder %s19, 1
    %p49 = por %p47, %p48
    %p50 = scmp.ne.s32.totalorder %s39, %s40
    %p51 = scmp.eq.s32.totalorder %s19, 0
    %p52 = por %p50, %p51
    %p53 = scmp.ne.s32.totalorder %s39, %s40
    %p54 = scmp.eq.s32.totalorder %s20, 1
    %p55 = por %p53, %p54
    %p57 = scmp.ne.s32.totalorder %s40, %s56
    %p58 = scmp.eq.s32.totalorder %s20, 0
    %p59 = por %p57, %p58
    %s61 = sadd.s32 %s60, 1
    %p64 = scmp.eq.s32.totalorder %s14, 1
    %p65 = scmp.ne.s32.totalorder %s60, %s62
    %p66 = scmp.eq.s32.totalorder %s14, 0
    %p67 = por %p65, %p66
    %p68 = scmp.ne.s32.totalorder %s60, %s62
    %p69 = scmp.eq.s32.totalorder %s19, 1
    %p70 = por %p68, %p69
    %p71 = scmp.ne.s32.totalorder %s62, %s63
    %p72 = scmp.eq.s32.totalorder %s19, 0
    %p73 = por %p71, %p72
    %p74 = scmp.ne.s32.totalorder %s62, %s63
    %p75 = scmp.eq.s32.totalorder %s20, 1
    %p76 = por %p74, %p75
    %p78 = scmp.ne.s32.totalorder %s63, %s77
    %p79 = scmp.eq.s32.totalorder %s20, 0
    %p80 = por %p78, %p79
    %s82 = sadd.s32 %s81, 1
    %p85 = scmp.eq.s32.totalorder %s14, 1
    %p86 = scmp.ne.s32.totalorder %s81, %s83
    %p87 = scmp.eq.s32.totalorder %s14, 0
    %p88 = por %p86, %p87
    %p89 = scmp.ne.s32.totalorder %s81, %s83
    %p90 = scmp.eq.s32.totalorder %s19, 1
    %p91 = por %p89, %p90
    %p92 = scmp.ne.s32.totalorder %s83, %s84
    %p93 = scmp.eq.s32.totalorder %s19, 0
    %p94 = por %p92, %p93
    %p95 = scmp.ne.s32.totalorder %s83, %s84
    %p96 = scmp.eq.s32.totalorder %s20, 1
    %p97 = por %p95, %p96
    %p99 = scmp.ne.s32.totalorder %s84, %s98
    %p100 = scmp.eq.s32.totalorder %s20, 0
    %p101 = por %p99, %p100
    %s103 = sadd.s32 %s102, 1
    %p106 = scmp.eq.s32.totalorder %s14, 1
    %p107 = scmp.ne.s32.totalorder %s102, %s104
    %p108 = scmp.eq.s32.totalorder %s14, 0
    %p109 = por %p107, %p108
    %p110 = scmp.ne.s32.totalorder %s102, %s104
    %p111 = scmp.eq.s32.totalorder %s19, 1
    %p112 = por %p110, %p111
    %p113 = scmp.ne.s32.totalorder %s104, %s105
    %p114 = scmp.eq.s32.totalorder %s19, 0
    %p115 = por %p113, %p114
    %p116 = scmp.ne.s32.totalorder %s104, %s105
    %p117 = scmp.eq.s32.totalorder %s20, 1
    %p118 = por %p116, %p117
    %p120 = scmp.ne.s32.totalorder %s105, %s119
    %p121 = scmp.eq.s32.totalorder %s20, 0
    %p122 = por %p120, %p121
    %s124 = sadd.s32 %s123, 1
    %p127 = scmp.eq.s32.totalorder %s14, 1
    %p128 = scmp.ne.s32.totalorder %s123, %s125
    %p129 = scmp.eq.s32.totalorder %s14, 0
    %p130 = por %p128, %p129
    %p131 = scmp.ne.s32.totalorder %s123, %s125
    %p132 = scmp.eq.s32.totalorder %s19, 1
    %p133 = por %p131, %p132
    %p134 = scmp.ne.s32.totalorder %s125, %s126
    %p135 = scmp.eq.s32.totalorder %s19, 0
    %p136 = por %p134, %p135
    %p137 = scmp.ne.s32.totalorder %s125, %s126
    %p138 = scmp.eq.s32.totalorder %s20, 1
    %p139 = por %p137, %p138
    %p141 = scmp.ne.s32.totalorder %s126, %s140
    %p142 = scmp.eq.s32.totalorder %s20, 0
    %p143 = por %p141, %p142
    %s145 = sadd.s32 %s144, 1
    %p148 = scmp.eq.s32.totalorder %s14, 1
    %p149 = scmp.ne.s32.totalorder %s144, %s146
    %p150 = scmp.eq.s32.totalorder %s14, 0
    %p151 = por %p149, %p150
    %p152 = scmp.ne.s32.totalorder %s144, %s146
    %p153 = scmp.eq.s32.totalorder %s19, 1
    %p154 = por %p152, %p153
    %p155 = scmp.ne.s32.totalorder %s146, %s147
    %p156 = scmp.eq.s32.totalorder %s19, 0
    %p157 = por %p155, %p156
    %p158 = scmp.ne.s32.totalorder %s146, %s147
    %p159 = scmp.eq.s32.totalorder %s20, 1
    %p160 = por %p158, %p159
    %p162 = scmp.ne.s32.totalorder %s147, %s161
    %p163 = scmp.eq.s32.totalorder %s20, 0
    %p164 = por %p162, %p163
    %s166 = sadd.s32 %s165, 1
    %p169 = scmp.eq.s32.totalorder %s14, 1
    %p170 = scmp.ne.s32.totalorder %s165, %s167
    %p171 = scmp.eq.s32.totalorder %s14, 0
    %p172 = por %p170, %p171
    %p173 = scmp.ne.s32.totalorder %s165, %s167
    %p174 = scmp.eq.s32.totalorder %s19, 1
    %p175 = por %p173, %p174
    %p176 = scmp.ne.s32.totalorder %s167, %s168
    %p177 = scmp.eq.s32.totalorder %s19, 0
    %p178 = por %p176, %p177
    %p179 = scmp.ne.s32.totalorder %s167, %s168
    %p180 = scmp.eq.s32.totalorder %s20, 1
    %p181 = por %p179, %p180
    %p183 = scmp.ne.s32.totalorder %s168, %s182
    %p184 = scmp.eq.s32.totalorder %s20, 0
    %p185 = por %p183, %p184
    %s187 = sadd.s32 %s186, 1
    %p190 = scmp.eq.s32.totalorder %s14, 1
    %p191 = scmp.ne.s32.totalorder %s186, %s188
    %p192 = scmp.eq.s32.totalorder %s14, 0
    %p193 = por %p191, %p192
    %p194 = scmp.ne.s32.totalorder %s186, %s188
    %p195 = scmp.eq.s32.totalorder %s19, 1
    %p196 = por %p194, %p195
    %p197 = scmp.ne.s32.totalorder %s188, %s189
    %p198 = scmp.eq.s32.totalorder %s19, 0
    %p199 = por %p197, %p198
    %p200 = scmp.ne.s32.totalorder %s188, %s189
    %p201 = scmp.eq.s32.totalorder %s20, 1
    %p202 = por %p200, %p201
    %p204 = scmp.ne.s32.totalorder %s189, %s203
    %p205 = scmp.eq.s32.totalorder %s20, 0
    %p206 = por %p204, %p205
    %s207 = ssub.s32 %s22, %s29
    %p208 = scmp.eq.s32.totalorder %s207, 0
    %s210 = sadd.s32 %s209, 1
    %s211 = scalar_select %p208, %s209, %s210
    %p214 = pneg %p208
    %p215 = scmp.eq.s32.totalorder %s14, 1
    %p216 = por %p214, %p215
    %p217 = scmp.ne.s32.totalorder %s209, %s212
    %p218 = scmp.eq.s32.totalorder %s14, 0
    %p219 = por %p217, %p218
    %p220 = scmp.ne.s32.totalorder %s209, %s212
    %p221 = scmp.eq.s32.totalorder %s19, 1
    %p222 = por %p220, %p221
    %p223 = scmp.ne.s32.totalorder %s212, %s213
    %p224 = scmp.eq.s32.totalorder %s19, 0
    %p225 = por %p223, %p224
    %p226 = scmp.ne.s32.totalorder %s212, %s213
    %p227 = scmp.eq.s32.totalorder %s20, 1
    %p228 = por %p226, %p227
    %p230 = scmp.ne.s32.totalorder %s213, %s229
    %p231 = scmp.eq.s32.totalorder %s20, 0
    %p232 = por %p230, %p231
    %p233 = scmp.le.s32.totalorder 1, %s14
    %p234 = scmp.lt.s32.totalorder %s14, 3
    %p235 = pnand %p233, %p234
    %p236 = pneg %p235
    // Predicated region
    $region9: #{gcn_forward.1} parent=5 // pred_check
      _
    $region10: #{gcn_forward.1} parent=5 // pred_check_branch
      %238 = sbr.rel (%p235) target = $region12
    $region11: #{gcn_forward.1} parent=5 // pred_region
      %s239 = ssub.s32 %s14, 1
      // Predicated region
      $region13: #{gcn_forward.1} parent=11 // pred_check
        %p240 = pneg %p52
      $region14: #{gcn_forward.1} parent=11 // pred_check_branch
        %242 = sbr.rel (%p240) target = $region16
      $region15: #{gcn_forward.1} parent=11 // pred_region
        %s243 = smul.u32 16, %s24
        %p244 = scmp.lt.s32.totalorder %s243, 15
        %s245 = scalar_select %p244, %s243, 15
        %s246 = smul.addr %s245, 8
        %s247 = scalar_lea.vmem %s0, %s246
        %s248 = smul.u32 16, %s24
      $region16: #{gcn_forward.1} parent=11 // pred_fallthru
        _
      // Predicated region
      $region17: #{gcn_forward.1} parent=11 // pred_check
        %p249 = pneg %p73
      $region18: #{gcn_forward.1} parent=11 // pred_check_branch
        %251 = sbr.rel (%p249) target = $region20
      $region19: #{gcn_forward.1} parent=11 // pred_region
        _
      $region20: #{gcn_forward.1} parent=11 // pred_fallthru
        _
      // Predicated region
      $region21: #{gcn_forward.1} parent=11 // pred_check
        %p252 = pneg %p94
      $region22: #{gcn_forward.1} parent=11 // pred_check_branch
        %254 = sbr.rel (%p252) target = $region24
      $region23: #{gcn_forward.1} parent=11 // pred_region
        _
      $region24: #{gcn_forward.1} parent=11 // pred_fallthru
        _
      // Predicated region
      $region25: #{gcn_forward.1} parent=11 // pred_check
        %p255 = pneg %p115
      $region26: #{gcn_forward.1} parent=11 // pred_check_branch
        %257 = sbr.rel (%p255) target = $region28
      $region27: #{gcn_forward.1} parent=11 // pred_region
        _
      $region28: #{gcn_forward.1} parent=11 // pred_fallthru
        _
      // Predicated region
      $region29: #{gcn_forward.1} parent=11 // pred_check
        %p258 = pneg %p136
      $region30: #{gcn_forward.1} parent=11 // pred_check_branch
        %260 = sbr.rel (%p258) target = $region32
      $region31: #{gcn_forward.1} parent=11 // pred_region
        _
      $region32: #{gcn_forward.1} parent=11 // pred_fallthru
        _
      // Predicated region
      $region33: #{gcn_forward.1} parent=11 // pred_check
        %p261 = pneg %p157
      $region34: #{gcn_forward.1} parent=11 // pred_check_branch
        %263 = sbr.rel (%p261) target = $region36
      $region35: #{gcn_forward.1} parent=11 // pred_region
        _
      $region36: #{gcn_forward.1} parent=11 // pred_fallthru
        _
      // Predicated region
      $region37: #{gcn_forward.1} parent=11 // pred_check
        %p264 = pneg %p178
      $region38: #{gcn_forward.1} parent=11 // pred_check_branch
        %266 = sbr.rel (%p264) target = $region40
      $region39: #{gcn_forward.1} parent=11 // pred_region
        _
      $region40: #{gcn_forward.1} parent=11 // pred_fallthru
        _
      // Predicated region
      $region41: #{gcn_forward.1} parent=11 // pred_check
        %p267 = pneg %p199
      $region42: #{gcn_forward.1} parent=11 // pred_check_branch
        %269 = sbr.rel (%p267) target = $region44
      $region43: #{gcn_forward.1} parent=11 // pred_region
        _
      $region44: #{gcn_forward.1} parent=11 // pred_fallthru
        _
    $region12: #{gcn_forward.1} parent=5 // pred_fallthru
      _
    %p270 = scmp.lt.s32.totalorder %s14, 2
    // Predicated region
    $region45: #{gcn_forward.1} parent=5 // pred_check
      %p271 = pneg %p270
    $region46: #{gcn_forward.1} parent=5 // pred_check_branch
      %273 = sbr.rel (%p271) target = $region48
    $region47: #{gcn_forward.1} parent=5 // pred_region
      _
    $region48: #{gcn_forward.1} parent=5 // pred_fallthru
      _
    %p274 = scmp.le.s32.totalorder 1, %s14
    %p275 = scmp.lt.s32.totalorder %s14, 3
    %p276 = pnand %p274, %p275
    %p277 = pneg %p276
    // Predicated region
    $region49: #{gcn_forward.1} parent=5 // pred_check
      _
    $region50: #{gcn_forward.1} parent=5 // pred_check_branch
      %279 = sbr.rel (%p276) target = $region52
    $region51: #{gcn_forward.1} parent=5 // pred_region
      %s280 = ssub.s32 %s14, 1
      %s281 = smul.u32 16, %s24
      %p282 = scmp.lt.s32.totalorder %s281, 15
      %s283 = scalar_select %p282, %s281, 15
      %s284 = smul.addr %s283, 8
      %s285 = scalar_lea.vmem %s0, %s284
      %p286 = pneg %p52
      %p287 = pneg %p49
      %p288 = pneg %p73
      %p289 = pneg %p70
      %p290 = pneg %p94
      %p291 = pneg %p91
      %p292 = pneg %p115
      %p293 = pneg %p112
      %p294 = pneg %p136
      %p295 = pneg %p133
      %p296 = pneg %p157
      %p297 = pneg %p154
      %p298 = pneg %p178
      %p299 = pneg %p175
      %p300 = pneg %p199
      %p301 = pneg %p196
      %p302 = pneg %p225
      %p303 = pneg %p222
      %s304 = smul.u32 16, %s24
      %p305 = scmp.lt.s32.totalorder %s304, 15
      %s306 = scalar_select %p305, %s304, 15
      %s307 = smul.addr %s306, 8
      %s308 = scalar_lea.vmem %s8, %s307
      %s309 = smul.u32 16, %s24
      %p310 = scmp.lt.s32.totalorder %s309, 15
      %s311 = scalar_select %p310, %s309, 15
      %s312 = smul.addr %s311, 8
      %s313 = scalar_lea.vmem %s0, %s312
      %s314 = smul.u32 16, %s24
      %s315 = smul.u32 16, %s24
      %p316 = scmp.lt.s32.totalorder %s315, 15
      %s317 = scalar_select %p316, %s315, 15
      %s318 = smul.addr %s317, 8
      %s319 = scalar_lea.vmem %s8, %s318
      %s320 = smul.u32 16, %s24
      %s321 = smul.u32 %s24, 128
      %p322 = scmp.eq.s32.totalorder %s23, 0
      // Predicated region
      $region53: #{gcn_forward.1} parent=51 // pred_check
        %p323 = pneg %p322
      $region54: #{gcn_forward.1} parent=51 // pred_check_branch
        %325 = sbr.rel (%p323) target = $region56
      $region55: #{gcn_forward.1} parent=51 // pred_region
        %v326 = vld [vmem:[%s313] sm:$0xff]
        %v327 = vld [vmem:[%s313 + $0x8] sm:$0xff]
        %v328 = vld [vmem:[%s313 + $0x10] sm:$0xff]
        %v329 = vld [vmem:[%s313 + $0x18] sm:$0xff]
        %v330 = vld [vmem:[%s313 + $0x20] sm:$0xff]
        %v331 = vld [vmem:[%s313 + $0x28] sm:$0xff]
        %v332 = vld [vmem:[%s313 + $0x30] sm:$0xff]
        %v333 = vld [vmem:[%s313 + $0x38] sm:$0xff]
        %v334 = vld [vmem:[%s313 + $0x40] sm:$0xff]
        %v335 = vld [vmem:[%s313 + $0x48] sm:$0xff]
        %v336 = vld [vmem:[%s313 + $0x50] sm:$0xff]
        %v337 = vld [vmem:[%s313 + $0x58] sm:$0xff]
        %v338 = vld [vmem:[%s313 + $0x60] sm:$0xff]
        %v339 = vld [vmem:[%s313 + $0x68] sm:$0xff]
        %v340 = vld [vmem:[%s313 + $0x70] sm:$0xff]
        %v341 = vld [vmem:[%s313 + $0x78] sm:$0xff]
        %v342 = vld [vmem:[%s1] sm:$0xff]
        %v343 = vld [vmem:[%s1 + $0x8] sm:$0xff]
        %v344 = vld [vmem:[%s1 + $0x10] sm:$0xff]
        %v345 = vld [vmem:[%s1 + $0x18] sm:$0xff]
        %v346 = vld [vmem:[%s1 + $0x20] sm:$0xff]
        %v347 = vld [vmem:[%s1 + $0x28] sm:$0xff]
        %v348 = vld [vmem:[%s1 + $0x30] sm:$0xff]
        %v349 = vld [vmem:[%s1 + $0x38] sm:$0xff]
        %v350 = vld [vmem:[%s1 + $0x40] sm:$0xff]
        %v351 = vld [vmem:[%s1 + $0x48] sm:$0xff]
        %v352 = vld [vmem:[%s1 + $0x50] sm:$0xff]
        %v353 = vld [vmem:[%s1 + $0x58] sm:$0xff]
        %v354 = vld [vmem:[%s1 + $0x60] sm:$0xff]
        %v355 = vld [vmem:[%s1 + $0x68] sm:$0xff]
        %v356 = vld [vmem:[%s1 + $0x70] sm:$0xff]
        %v357 = vld [vmem:[%s1 + $0x78] sm:$0xff]
        %358 = vmatpush.msra.mxu0 %v357
        %359 = vmatpush.msra.mxu0 %v356
        %360 = vmatpush.msra.mxu0 %v355
        %361 = vmatpush.msra.mxu0 %v354
        %362 = vmatpush.msra.mxu0 %v353
        %363 = vmatpush.msra.mxu0 %v352
        %364 = vmatpush.msra.mxu0 %v351
        %365 = vmatpush.msra.mxu0 %v350
        %366 = vmatpush.msra.mxu0 %v349
        %367 = vmatpush.msra.mxu0 %v348
        %368 = vmatpush.msra.mxu0 %v347
        %369 = vmatpush.msra.mxu0 %v346
        %370 = vmatpush.msra.mxu0 %v345
        %371 = vmatpush.msra.mxu0 %v344
        %372 = vmatpush.msra.mxu0 %v343
        %373 = vmatpush.msra.mxu0 %v342
        %374 = vmatmul.f32.gmra.mxu0 %v326
        %v375 = vpop.f32.mrf.mxu0
        %v376 = vadd.f32 0.0, %v375
        %377 = vmatmul.f32.gmra.mxu0 %v327
        %v378 = vpop.f32.mrf.mxu0
        %v379 = vadd.f32 0.0, %v378
        %380 = vmatmul.f32.gmra.mxu0 %v328
        %v381 = vpop.f32.mrf.mxu0
        %v382 = vadd.f32 0.0, %v381
        %383 = vmatmul.f32.gmra.mxu0 %v329
        %v384 = vpop.f32.mrf.mxu0
        %v385 = vadd.f32 0.0, %v384
        %386 = vmatmul.f32.gmra.mxu0 %v330
        %v387 = vpop.f32.mrf.mxu0
        %v388 = vadd.f32 0.0, %v387
        %389 = vmatmul.f32.gmra.mxu0 %v331
        %v390 = vpop.f32.mrf.mxu0
        %v391 = vadd.f32 0.0, %v390
        %392 = vmatmul.f32.gmra.mxu0 %v332
        %v393 = vpop.f32.mrf.mxu0
        %v394 = vadd.f32 0.0, %v393
        %395 = vmatmul.f32.gmra.mxu0 %v333
        %v396 = vpop.f32.mrf.mxu0
        %v397 = vadd.f32 0.0, %v396
        %398 = vmatmul.f32.gmra.mxu0 %v334
        %v399 = vpop.f32.mrf.mxu0
        %v400 = vadd.f32 0.0, %v399
        %401 = vmatmul.f32.gmra.mxu0 %v335
        %v402 = vpop.f32.mrf.mxu0
        %v403 = vadd.f32 0.0, %v402
        %404 = vmatmul.f32.gmra.mxu0 %v336
        %v405 = vpop.f32.mrf.mxu0
        %v406 = vadd.f32 0.0, %v405
        %407 = vmatmul.f32.gmra.mxu0 %v337
        %v408 = vpop.f32.mrf.mxu0
        %v409 = vadd.f32 0.0, %v408
        %410 = vmatmul.f32.gmra.mxu0 %v338
        %v411 = vpop.f32.mrf.mxu0
        %v412 = vadd.f32 0.0, %v411
        %413 = vmatmul.f32.gmra.mxu0 %v339
        %v414 = vpop.f32.mrf.mxu0
        %v415 = vadd.f32 0.0, %v414
        %416 = vmatmul.f32.gmra.mxu0 %v340
        %v417 = vpop.f32.mrf.mxu0
        %v418 = vadd.f32 0.0, %v417
        %419 = vmatmul.f32.gmra.mxu0 %v341
        %v420 = vpop.f32.mrf.mxu0
        %v421 = vadd.f32 0.0, %v420
        %422 = vdwg.mxu0
        %s423 = scalar_lea.vmem %s1, %s321
        %v424 = vld [vmem:[%s423] sm:$0xff]
        %v425 = vld [vmem:[%s423 + $0x8] sm:$0xff]
        %v426 = vld [vmem:[%s423 + $0x10] sm:$0xff]
        %v427 = vld [vmem:[%s423 + $0x18] sm:$0xff]
        %v428 = vld [vmem:[%s423 + $0x20] sm:$0xff]
        %v429 = vld [vmem:[%s423 + $0x28] sm:$0xff]
        %v430 = vld [vmem:[%s423 + $0x30] sm:$0xff]
        %v431 = vld [vmem:[%s423 + $0x38] sm:$0xff]
        %v432 = vld [vmem:[%s423 + $0x40] sm:$0xff]
        %v433 = vld [vmem:[%s423 + $0x48] sm:$0xff]
        %v434 = vld [vmem:[%s423 + $0x50] sm:$0xff]
        %v435 = vld [vmem:[%s423 + $0x58] sm:$0xff]
        %v436 = vld [vmem:[%s423 + $0x60] sm:$0xff]
        %v437 = vld [vmem:[%s423 + $0x68] sm:$0xff]
        %v438 = vld [vmem:[%s423 + $0x70] sm:$0xff]
        %v439 = vld [vmem:[%s423 + $0x78] sm:$0xff]
        %v440 = vld [vmem:[%s2] sm:$0xf]
        %v441 = vld [vmem:[%s3] sm:$0xf]
        %vm442 = vcmask 31744
        %v444 = vsel %vm442, %v424, 0
        %v447 = vsel %vm442, %v425, 0
        %v450 = vsel %vm442, %v426, 0
        %v453 = vsel %vm442, %v427, 0
        %v456 = vsel %vm442, %v428, 0
        %v459 = vsel %vm442, %v429, 0
        %v462 = vsel %vm442, %v430, 0
        %v465 = vsel %vm442, %v431, 0
        %v468 = vsel %vm442, %v432, 0
        %v471 = vsel %vm442, %v433, 0
        %v474 = vsel %vm442, %v434, 0
        %v477 = vsel %vm442, %v435, 0
        %v480 = vsel %vm442, %v436, 0
        %v483 = vsel %vm442, %v437, 0
        %v486 = vsel %vm442, %v438, 0
        %v489 = vsel %vm442, %v439, 0
        %vm491 = vcmask 1043456
        %v493 = vsel %vm491, %v441, 0
        %495 = vmatpush.msra.mxu0 0.0
        %496 = vmatpush.msra.mxu0 0.0
        %497 = vmatpush.msra.mxu0 0.0
        %498 = vmatpush.msra.mxu0 0.0
        %499 = vmatpush.msra.mxu0 0.0
        %500 = vmatpush.msra.mxu0 0.0
        %501 = vmatpush.msra.mxu0 0.0
        %502 = vmatpush.msra.mxu0 0.0
        %503 = vmatpush.msra.mxu0 0.0
        %504 = vmatpush.msra.mxu0 0.0
        %505 = vmatpush.msra.mxu0 0.0
        %506 = vmatpush.msra.mxu0 0.0
        %507 = vmatpush.msra.mxu0 0.0
        %508 = vmatpush.msra.mxu0 0.0
        %509 = vmatpush.msra.mxu0 0.0
        %510 = vmatpush.msra.mxu0 %v493
        %511 = vmatmul.f32.gmra.mxu0 %v444
        %v512 = vpop.f32.mrf.mxu0
        %v513 = vadd.f32 0.0, %v512
        %514 = vmatmul.f32.gmra.mxu0 %v447
        %v515 = vpop.f32.mrf.mxu0
        %v516 = vadd.f32 0.0, %v515
        %517 = vmatmul.f32.gmra.mxu0 %v450
        %v518 = vpop.f32.mrf.mxu0
        %v519 = vadd.f32 0.0, %v518
        %520 = vmatmul.f32.gmra.mxu0 %v453
        %v521 = vpop.f32.mrf.mxu0
        %v522 = vadd.f32 0.0, %v521
        %523 = vmatmul.f32.gmra.mxu0 %v456
        %v524 = vpop.f32.mrf.mxu0
        %v525 = vadd.f32 0.0, %v524
        %526 = vmatmul.f32.gmra.mxu0 %v459
        %v527 = vpop.f32.mrf.mxu0
        %v528 = vadd.f32 0.0, %v527
        %529 = vmatmul.f32.gmra.mxu0 %v462
        %v530 = vpop.f32.mrf.mxu0
        %v531 = vadd.f32 0.0, %v530
        %532 = vmatmul.f32.gmra.mxu0 %v465
        %v533 = vpop.f32.mrf.mxu0
        %v534 = vadd.f32 0.0, %v533
        %535 = vmatmul.f32.gmra.mxu0 %v468
        %v536 = vpop.f32.mrf.mxu0
        %v537 = vadd.f32 0.0, %v536
        %538 = vmatmul.f32.gmra.mxu0 %v471
        %v539 = vpop.f32.mrf.mxu0
        %v540 = vadd.f32 0.0, %v539
        %541 = vmatmul.f32.gmra.mxu0 %v474
        %v542 = vpop.f32.mrf.mxu0
        %v543 = vadd.f32 0.0, %v542
        %544 = vmatmul.f32.gmra.mxu0 %v477
        %v545 = vpop.f32.mrf.mxu0
        %v546 = vadd.f32 0.0, %v545
        %547 = vmatmul.f32.gmra.mxu0 %v480
        %v548 = vpop.f32.mrf.mxu0
        %v549 = vadd.f32 0.0, %v548
        %550 = vmatmul.f32.gmra.mxu0 %v483
        %v551 = vpop.f32.mrf.mxu0
        %v552 = vadd.f32 0.0, %v551
        %553 = vmatmul.f32.gmra.mxu0 %v486
        %v554 = vpop.f32.mrf.mxu0
        %v555 = vadd.f32 0.0, %v554
        %556 = vmatmul.f32.gmra.mxu0 %v489
        %v557 = vpop.f32.mrf.mxu0
        %v558 = vadd.f32 0.0, %v557
        %559 = vdwg.mxu0
        %v561 = vsel %vm442, %v376, 0
        %v564 = vsel %vm442, %v379, 0
        %v567 = vsel %vm442, %v382, 0
        %v570 = vsel %vm442, %v385, 0
        %v573 = vsel %vm442, %v388, 0
        %v576 = vsel %vm442, %v391, 0
        %v579 = vsel %vm442, %v394, 0
        %v582 = vsel %vm442, %v397, 0
        %v585 = vsel %vm442, %v400, 0
        %v588 = vsel %vm442, %v403, 0
        %v591 = vsel %vm442, %v406, 0
        %v594 = vsel %vm442, %v409, 0
        %v597 = vsel %vm442, %v412, 0
        %v600 = vsel %vm442, %v415, 0
        %v603 = vsel %vm442, %v418, 0
        %v606 = vsel %vm442, %v421, 0
        %v609 = vsel %vm491, %v440, 0
        %611 = vmatpush.msra.mxu0 0.0
        %612 = vmatpush.msra.mxu0 0.0
        %613 = vmatpush.msra.mxu0 0.0
        %614 = vmatpush.msra.mxu0 0.0
        %615 = vmatpush.msra.mxu0 0.0
        %616 = vmatpush.msra.mxu0 0.0
        %617 = vmatpush.msra.mxu0 0.0
        %618 = vmatpush.msra.mxu0 0.0
        %619 = vmatpush.msra.mxu0 0.0
        %620 = vmatpush.msra.mxu0 0.0
        %621 = vmatpush.msra.mxu0 0.0
        %622 = vmatpush.msra.mxu0 0.0
        %623 = vmatpush.msra.mxu0 0.0
        %624 = vmatpush.msra.mxu0 0.0
        %625 = vmatpush.msra.mxu0 0.0
        %626 = vmatpush.msra.mxu0 %v609
        %627 = vmatmul.f32.gmra.mxu0 %v561
        %v628 = vpop.f32.mrf.mxu0
        %v629 = vadd.f32 %v513, %v628
        %630 = vmatmul.f32.gmra.mxu0 %v564
        %v631 = vpop.f32.mrf.mxu0
        %v632 = vadd.f32 %v516, %v631
        %633 = vmatmul.f32.gmra.mxu0 %v567
        %v634 = vpop.f32.mrf.mxu0
        %v635 = vadd.f32 %v519, %v634
        %636 = vmatmul.f32.gmra.mxu0 %v570
        %v637 = vpop.f32.mrf.mxu0
        %v638 = vadd.f32 %v522, %v637
        %639 = vmatmul.f32.gmra.mxu0 %v573
        %v640 = vpop.f32.mrf.mxu0
        %v641 = vadd.f32 %v525, %v640
        %642 = vmatmul.f32.gmra.mxu0 %v576
        %v643 = vpop.f32.mrf.mxu0
        %v644 = vadd.f32 %v528, %v643
        %645 = vmatmul.f32.gmra.mxu0 %v579
        %v646 = vpop.f32.mrf.mxu0
        %v647 = vadd.f32 %v531, %v646
        %648 = vmatmul.f32.gmra.mxu0 %v582
        %v649 = vpop.f32.mrf.mxu0
        %v650 = vadd.f32 %v534, %v649
        %651 = vmatmul.f32.gmra.mxu0 %v585
        %v652 = vpop.f32.mrf.mxu0
        %v653 = vadd.f32 %v537, %v652
        %654 = vmatmul.f32.gmra.mxu0 %v588
        %v655 = vpop.f32.mrf.mxu0
        %v656 = vadd.f32 %v540, %v655
        %657 = vmatmul.f32.gmra.mxu0 %v591
        %v658 = vpop.f32.mrf.mxu0
        %v659 = vadd.f32 %v543, %v658
        %660 = vmatmul.f32.gmra.mxu0 %v594
        %v661 = vpop.f32.mrf.mxu0
        %v662 = vadd.f32 %v546, %v661
        %663 = vmatmul.f32.gmra.mxu0 %v597
        %v664 = vpop.f32.mrf.mxu0
        %v665 = vadd.f32 %v549, %v664
        %666 = vmatmul.f32.gmra.mxu0 %v600
        %v667 = vpop.f32.mrf.mxu0
        %v668 = vadd.f32 %v552, %v667
        %669 = vmatmul.f32.gmra.mxu0 %v603
        %v670 = vpop.f32.mrf.mxu0
        %v671 = vadd.f32 %v555, %v670
        %672 = vmatmul.f32.gmra.mxu0 %v606
        %v673 = vpop.f32.mrf.mxu0
        %v674 = vadd.f32 %v558, %v673
        %675 = vdwg.mxu0
        %v676 = vld [vmem:[%s4] sm:$0x1]
        %v678 = vperm.slane %v676, 0
        %v680 = vadd.f32 %v629, %v678
        %v681 = vadd.f32 %v632, %v678
        %v682 = vadd.f32 %v635, %v678
        %v683 = vadd.f32 %v638, %v678
        %v684 = vadd.f32 %v641, %v678
        %v685 = vadd.f32 %v644, %v678
        %v686 = vadd.f32 %v647, %v678
        %v687 = vadd.f32 %v650, %v678
        %v688 = vadd.f32 %v653, %v678
        %v689 = vadd.f32 %v656, %v678
        %v690 = vadd.f32 %v659, %v678
        %v691 = vadd.f32 %v662, %v678
        %v692 = vadd.f32 %v665, %v678
        %v693 = vadd.f32 %v668, %v678
        %v694 = vadd.f32 %v671, %v678
        %v695 = vadd.f32 %v674, %v678
        %v696 = vmul.f32 %v680, %v680
        %v697 = vmul.f32 %v681, %v681
        %v698 = vmul.f32 %v682, %v682
        %v699 = vmul.f32 %v683, %v683
        %v700 = vmul.f32 %v684, %v684
        %v701 = vmul.f32 %v685, %v685
        %v702 = vmul.f32 %v686, %v686
        %v703 = vmul.f32 %v687, %v687
        %v704 = vmul.f32 %v688, %v688
        %v705 = vmul.f32 %v689, %v689
        %v706 = vmul.f32 %v690, %v690
        %v707 = vmul.f32 %v691, %v691
        %v708 = vmul.f32 %v692, %v692
        %v709 = vmul.f32 %v693, %v693
        %v710 = vmul.f32 %v694, %v694
        %v711 = vmul.f32 %v695, %v695
        %vm712 = vcmask 261120
        %v713 = vsel %vm712, %v696, 0.0
        %714 = vadd.xlane.f32.xlu0 %v713
        %v715 = vpop.xlane.xlu0 %714
        %v716 = vsel %vm712, %v697, 0.0
        %717 = vadd.xlane.f32.xlu0 %v716
        %v718 = vpop.xlane.xlu0 %717
        %v719 = vsel %vm712, %v698, 0.0
        %720 = vadd.xlane.f32.xlu0 %v719
        %v721 = vpop.xlane.xlu0 %720
        %v722 = vsel %vm712, %v699, 0.0
        %723 = vadd.xlane.f32.xlu0 %v722
        %v724 = vpop.xlane.xlu0 %723
        %v725 = vsel %vm712, %v700, 0.0
        %726 = vadd.xlane.f32.xlu0 %v725
        %v727 = vpop.xlane.xlu0 %726
        %v728 = vsel %vm712, %v701, 0.0
        %729 = vadd.xlane.f32.xlu0 %v728
        %v730 = vpop.xlane.xlu0 %729
        %v731 = vsel %vm712, %v702, 0.0
        %732 = vadd.xlane.f32.xlu0 %v731
        %v733 = vpop.xlane.xlu0 %732
        %v734 = vsel %vm712, %v703, 0.0
        %735 = vadd.xlane.f32.xlu0 %v734
        %v736 = vpop.xlane.xlu0 %735
        %v737 = vsel %vm712, %v704, 0.0
        %738 = vadd.xlane.f32.xlu0 %v737
        %v739 = vpop.xlane.xlu0 %738
        %v740 = vsel %vm712, %v705, 0.0
        %741 = vadd.xlane.f32.xlu0 %v740
        %v742 = vpop.xlane.xlu0 %741
        %v743 = vsel %vm712, %v706, 0.0
        %744 = vadd.xlane.f32.xlu0 %v743
        %v745 = vpop.xlane.xlu0 %744
        %v746 = vsel %vm712, %v707, 0.0
        %747 = vadd.xlane.f32.xlu0 %v746
        %v748 = vpop.xlane.xlu0 %747
        %v749 = vsel %vm712, %v708, 0.0
        %750 = vadd.xlane.f32.xlu0 %v749
        %v751 = vpop.xlane.xlu0 %750
        %v752 = vsel %vm712, %v709, 0.0
        %753 = vadd.xlane.f32.xlu0 %v752
        %v754 = vpop.xlane.xlu0 %753
        %v755 = vsel %vm712, %v710, 0.0
        %756 = vadd.xlane.f32.xlu0 %v755
        %v757 = vpop.xlane.xlu0 %756
        %v758 = vsel %vm712, %v711, 0.0
        %759 = vadd.xlane.f32.xlu0 %v758
        %v760 = vpop.xlane.xlu0 %759
        %v761 = vmax.f32 %v715, 1e-24
        %v762 = vmax.f32 %v718, 1e-24
        %v763 = vmax.f32 %v721, 1e-24
        %v764 = vmax.f32 %v724, 1e-24
        %v765 = vmax.f32 %v727, 1e-24
        %v766 = vmax.f32 %v730, 1e-24
        %v767 = vmax.f32 %v733, 1e-24
        %v768 = vmax.f32 %v736, 1e-24
        %v769 = vmax.f32 %v739, 1e-24
        %v770 = vmax.f32 %v742, 1e-24
        %v771 = vmax.f32 %v745, 1e-24
        %v772 = vmax.f32 %v748, 1e-24
        %v773 = vmax.f32 %v751, 1e-24
        %v774 = vmax.f32 %v754, 1e-24
        %v775 = vmax.f32 %v757, 1e-24
        %v776 = vmax.f32 %v760, 1e-24
        %v777 = vrsqrt.pop %v761
        %v778 = vmul.f32 %v777, %v761
        %v779 = vmul.f32 %v778, %v777
        %v780 = vmul.f32 0.5, %v779
        %v781 = vsub.f32 1.5, %v780
        %v782 = vmul.f32 %v777, %v781
        %vm783 = vweird.f32 %v761
        %vm784 = vweird.f32 %v777
        %vm785 = vmor %vm783, %vm784
        %v786 = vsel %vm785, %v777, %v782
        %v787 = vrsqrt.pop %v762
        %v788 = vmul.f32 %v787, %v762
        %v789 = vmul.f32 %v788, %v787
        %v790 = vmul.f32 0.5, %v789
        %v791 = vsub.f32 1.5, %v790
        %v792 = vmul.f32 %v787, %v791
        %vm793 = vweird.f32 %v762
        %vm794 = vweird.f32 %v787
        %vm795 = vmor %vm793, %vm794
        %v796 = vsel %vm795, %v787, %v792
        %v797 = vrsqrt.pop %v763
        %v798 = vmul.f32 %v797, %v763
        %v799 = vmul.f32 %v798, %v797
        %v800 = vmul.f32 0.5, %v799
        %v801 = vsub.f32 1.5, %v800
        %v802 = vmul.f32 %v797, %v801
        %vm803 = vweird.f32 %v763
        %vm804 = vweird.f32 %v797
        %vm805 = vmor %vm803, %vm804
        %v806 = vsel %vm805, %v797, %v802
        %v807 = vrsqrt.pop %v764
        %v808 = vmul.f32 %v807, %v764
        %v809 = vmul.f32 %v808, %v807
        %v810 = vmul.f32 0.5, %v809
        %v811 = vsub.f32 1.5, %v810
        %v812 = vmul.f32 %v807, %v811
        %vm813 = vweird.f32 %v764
        %vm814 = vweird.f32 %v807
        %vm815 = vmor %vm813, %vm814
        %v816 = vsel %vm815, %v807, %v812
        %v817 = vrsqrt.pop %v765
        %v818 = vmul.f32 %v817, %v765
        %v819 = vmul.f32 %v818, %v817
        %v820 = vmul.f32 0.5, %v819
        %v821 = vsub.f32 1.5, %v820
        %v822 = vmul.f32 %v817, %v821
        %vm823 = vweird.f32 %v765
        %vm824 = vweird.f32 %v817
        %vm825 = vmor %vm823, %vm824
        %v826 = vsel %vm825, %v817, %v822
        %v827 = vrsqrt.pop %v766
        %v828 = vmul.f32 %v827, %v766
        %v829 = vmul.f32 %v828, %v827
        %v830 = vmul.f32 0.5, %v829
        %v831 = vsub.f32 1.5, %v830
        %v832 = vmul.f32 %v827, %v831
        %vm833 = vweird.f32 %v766
        %vm834 = vweird.f32 %v827
        %vm835 = vmor %vm833, %vm834
        %v836 = vsel %vm835, %v827, %v832
        %v837 = vrsqrt.pop %v767
        %v838 = vmul.f32 %v837, %v767
        %v839 = vmul.f32 %v838, %v837
        %v840 = vmul.f32 0.5, %v839
        %v841 = vsub.f32 1.5, %v840
        %v842 = vmul.f32 %v837, %v841
        %vm843 = vweird.f32 %v767
        %vm844 = vweird.f32 %v837
        %vm845 = vmor %vm843, %vm844
        %v846 = vsel %vm845, %v837, %v842
        %v847 = vrsqrt.pop %v768
        %v848 = vmul.f32 %v847, %v768
        %v849 = vmul.f32 %v848, %v847
        %v850 = vmul.f32 0.5, %v849
        %v851 = vsub.f32 1.5, %v850
        %v852 = vmul.f32 %v847, %v851
        %vm853 = vweird.f32 %v768
        %vm854 = vweird.f32 %v847
        %vm855 = vmor %vm853, %vm854
        %v856 = vsel %vm855, %v847, %v852
        %v857 = vrsqrt.pop %v769
        %v858 = vmul.f32 %v857, %v769
        %v859 = vmul.f32 %v858, %v857
        %v860 = vmul.f32 0.5, %v859
        %v861 = vsub.f32 1.5, %v860
        %v862 = vmul.f32 %v857, %v861
        %vm863 = vweird.f32 %v769
        %vm864 = vweird.f32 %v857
        %vm865 = vmor %vm863, %vm864
        %v866 = vsel %vm865, %v857, %v862
        %v867 = vrsqrt.pop %v770
        %v868 = vmul.f32 %v867, %v770
        %v869 = vmul.f32 %v868, %v867
        %v870 = vmul.f32 0.5, %v869
        %v871 = vsub.f32 1.5, %v870
        %v872 = vmul.f32 %v867, %v871
        %vm873 = vweird.f32 %v770
        %vm874 = vweird.f32 %v867
        %vm875 = vmor %vm873, %vm874
        %v876 = vsel %vm875, %v867, %v872
        %v877 = vrsqrt.pop %v771
        %v878 = vmul.f32 %v877, %v771
        %v879 = vmul.f32 %v878, %v877
        %v880 = vmul.f32 0.5, %v879
        %v881 = vsub.f32 1.5, %v880
        %v882 = vmul.f32 %v877, %v881
        %vm883 = vweird.f32 %v771
        %vm884 = vweird.f32 %v877
        %vm885 = vmor %vm883, %vm884
        %v886 = vsel %vm885, %v877, %v882
        %v887 = vrsqrt.pop %v772
        %v888 = vmul.f32 %v887, %v772
        %v889 = vmul.f32 %v888, %v887
        %v890 = vmul.f32 0.5, %v889
        %v891 = vsub.f32 1.5, %v890
        %v892 = vmul.f32 %v887, %v891
        %vm893 = vweird.f32 %v772
        %vm894 = vweird.f32 %v887
        %vm895 = vmor %vm893, %vm894
        %v896 = vsel %vm895, %v887, %v892
        %v897 = vrsqrt.pop %v773
        %v898 = vmul.f32 %v897, %v773
        %v899 = vmul.f32 %v898, %v897
        %v900 = vmul.f32 0.5, %v899
        %v901 = vsub.f32 1.5, %v900
        %v902 = vmul.f32 %v897, %v901
        %vm903 = vweird.f32 %v773
        %vm904 = vweird.f32 %v897
        %vm905 = vmor %vm903, %vm904
        %v906 = vsel %vm905, %v897, %v902
        %v907 = vrsqrt.pop %v774
        %v908 = vmul.f32 %v907, %v774
        %v909 = vmul.f32 %v908, %v907
        %v910 = vmul.f32 0.5, %v909
        %v911 = vsub.f32 1.5, %v910
        %v912 = vmul.f32 %v907, %v911
        %vm913 = vweird.f32 %v774
        %vm914 = vweird.f32 %v907
        %vm915 = vmor %vm913, %vm914
        %v916 = vsel %vm915, %v907, %v912
        %v917 = vrsqrt.pop %v775
        %v918 = vmul.f32 %v917, %v775
        %v919 = vmul.f32 %v918, %v917
        %v920 = vmul.f32 0.5, %v919
        %v921 = vsub.f32 1.5, %v920
        %v922 = vmul.f32 %v917, %v921
        %vm923 = vweird.f32 %v775
        %vm924 = vweird.f32 %v917
        %vm925 = vmor %vm923, %vm924
        %v926 = vsel %vm925, %v917, %v922
        %v927 = vrsqrt.pop %v776
        %v928 = vmul.f32 %v927, %v776
        %v929 = vmul.f32 %v928, %v927
        %v930 = vmul.f32 0.5, %v929
        %v931 = vsub.f32 1.5, %v930
        %v932 = vmul.f32 %v927, %v931
        %vm933 = vweird.f32 %v776
        %vm934 = vweird.f32 %v927
        %vm935 = vmor %vm933, %vm934
        %v936 = vsel %vm935, %v927, %v932
        %v937 = vmul.f32 %v680, %v786
        %v938 = vmul.f32 %v681, %v796
        %v939 = vmul.f32 %v682, %v806
        %v940 = vmul.f32 %v683, %v816
        %v941 = vmul.f32 %v684, %v826
        %v942 = vmul.f32 %v685, %v836
        %v943 = vmul.f32 %v686, %v846
        %v944 = vmul.f32 %v687, %v856
        %v945 = vmul.f32 %v688, %v866
        %v946 = vmul.f32 %v689, %v876
        %v947 = vmul.f32 %v690, %v886
        %v948 = vmul.f32 %v691, %v896
        %v949 = vmul.f32 %v692, %v906
        %v950 = vmul.f32 %v693, %v916
        %v951 = vmul.f32 %v694, %v926
        %v952 = vmul.f32 %v695, %v936
        %v953 = vmax.f32 %v937, 0.0
        %v954 = vmax.f32 %v938, 0.0
        %v955 = vmax.f32 %v939, 0.0
        %v956 = vmax.f32 %v940, 0.0
        %v957 = vmax.f32 %v941, 0.0
        %v958 = vmax.f32 %v942, 0.0
        %v959 = vmax.f32 %v943, 0.0
        %v960 = vmax.f32 %v944, 0.0
        %v961 = vmax.f32 %v945, 0.0
        %v962 = vmax.f32 %v946, 0.0
        %v963 = vmax.f32 %v947, 0.0
        %v964 = vmax.f32 %v948, 0.0
        %v965 = vmax.f32 %v949, 0.0
        %v966 = vmax.f32 %v950, 0.0
        %v967 = vmax.f32 %v951, 0.0
        %v968 = vmax.f32 %v952, 0.0
        %s969 = scalar_lea.vmem [#allocation2], %s321
        %970 = vst.msk [vmem:[%s969] sm:$0xff] %vm712, %v953
        %971 = vst.msk [vmem:[%s969 + $0x8] sm:$0xff] %vm712, %v954
        %972 = vst.msk [vmem:[%s969 + $0x10] sm:$0xff] %vm712, %v955
        %973 = vst.msk [vmem:[%s969 + $0x18] sm:$0xff] %vm712, %v956
        %974 = vst.msk [vmem:[%s969 + $0x20] sm:$0xff] %vm712, %v957
        %975 = vst.msk [vmem:[%s969 + $0x28] sm:$0xff] %vm712, %v958
        %976 = vst.msk [vmem:[%s969 + $0x30] sm:$0xff] %vm712, %v959
        %977 = vst.msk [vmem:[%s969 + $0x38] sm:$0xff] %vm712, %v960
        %978 = vst.msk [vmem:[%s969 + $0x40] sm:$0xff] %vm712, %v961
        %979 = vst.msk [vmem:[%s969 + $0x48] sm:$0xff] %vm712, %v962
        %980 = vst.msk [vmem:[%s969 + $0x50] sm:$0xff] %vm712, %v963
        %981 = vst.msk [vmem:[%s969 + $0x58] sm:$0xff] %vm712, %v964
        %982 = vst.msk [vmem:[%s969 + $0x60] sm:$0xff] %vm712, %v965
        %983 = vst.msk [vmem:[%s969 + $0x68] sm:$0xff] %vm712, %v966
        %984 = vst.msk [vmem:[%s969 + $0x70] sm:$0xff] %vm712, %v967
        %985 = vst.msk [vmem:[%s969 + $0x78] sm:$0xff] %vm712, %v968
        %vm986 = vcmask 64512
        %987 = vst.msk [vmem:[%s319] sm:$0xff] %vm986, 0.0
        %988 = vst.msk [vmem:[%s319 + $0x8] sm:$0xff] %vm986, 0.0
        %989 = vst.msk [vmem:[%s319 + $0x10] sm:$0xff] %vm986, 0.0
        %990 = vst.msk [vmem:[%s319 + $0x18] sm:$0xff] %vm986, 0.0
        %991 = vst.msk [vmem:[%s319 + $0x20] sm:$0xff] %vm986, 0.0
        %992 = vst.msk [vmem:[%s319 + $0x28] sm:$0xff] %vm986, 0.0
        %993 = vst.msk [vmem:[%s319 + $0x30] sm:$0xff] %vm986, 0.0
        %994 = vst.msk [vmem:[%s319 + $0x38] sm:$0xff] %vm986, 0.0
        %995 = vst.msk [vmem:[%s319 + $0x40] sm:$0xff] %vm986, 0.0
        %996 = vst.msk [vmem:[%s319 + $0x48] sm:$0xff] %vm986, 0.0
        %997 = vst.msk [vmem:[%s319 + $0x50] sm:$0xff] %vm986, 0.0
        %998 = vst.msk [vmem:[%s319 + $0x58] sm:$0xff] %vm986, 0.0
        %999 = vst.msk [vmem:[%s319 + $0x60] sm:$0xff] %vm986, 0.0
        %1000 = vst.msk [vmem:[%s319 + $0x68] sm:$0xff] %vm986, 0.0
        %1001 = vst.msk [vmem:[%s319 + $0x70] sm:$0xff] %vm986, 0.0
        %1002 = vst.msk [vmem:[%s319 + $0x78] sm:$0xff] %vm986, 0.0
      $region56: #{gcn_forward.1} parent=51 // pred_fallthru
        _
      %p1003 = scmp.eq.s32.totalorder %s23, 1
      // Predicated region
      $region57: #{gcn_forward.1} parent=51 // pred_check
        %p1004 = pneg %p1003
      $region58: #{gcn_forward.1} parent=51 // pred_check_branch
        %1006 = sbr.rel (%p1004) target = $region60
      $region59: #{gcn_forward.1} parent=51 // pred_region
        %v1007 = vld [vmem:[%s313] sm:$0xff]
        %v1008 = vld [vmem:[%s313 + $0x8] sm:$0xff]
        %v1009 = vld [vmem:[%s313 + $0x10] sm:$0xff]
        %v1010 = vld [vmem:[%s313 + $0x18] sm:$0xff]
        %v1011 = vld [vmem:[%s313 + $0x20] sm:$0xff]
        %v1012 = vld [vmem:[%s313 + $0x28] sm:$0xff]
        %v1013 = vld [vmem:[%s313 + $0x30] sm:$0xff]
        %v1014 = vld [vmem:[%s313 + $0x38] sm:$0xff]
        %v1015 = vld [vmem:[%s313 + $0x40] sm:$0xff]
        %v1016 = vld [vmem:[%s313 + $0x48] sm:$0xff]
        %v1017 = vld [vmem:[%s313 + $0x50] sm:$0xff]
        %v1018 = vld [vmem:[%s313 + $0x58] sm:$0xff]
        %v1019 = vld [vmem:[%s313 + $0x60] sm:$0xff]
        %v1020 = vld [vmem:[%s313 + $0x68] sm:$0xff]
        %v1021 = vld [vmem:[%s313 + $0x70] sm:$0xff]
        %v1022 = vld [vmem:[%s313 + $0x78] sm:$0xff]
        %v1023 = vld [vmem:[#allocation2] sm:$0xff]
        %v1024 = vld [vmem:[#allocation2 + $0x8] sm:$0xff]
        %v1025 = vld [vmem:[#allocation2 + $0x10] sm:$0xff]
        %v1026 = vld [vmem:[#allocation2 + $0x18] sm:$0xff]
        %v1027 = vld [vmem:[#allocation2 + $0x20] sm:$0xff]
        %v1028 = vld [vmem:[#allocation2 + $0x28] sm:$0xff]
        %v1029 = vld [vmem:[#allocation2 + $0x30] sm:$0xff]
        %v1030 = vld [vmem:[#allocation2 + $0x38] sm:$0xff]
        %v1031 = vld [vmem:[#allocation2 + $0x40] sm:$0xff]
        %v1032 = vld [vmem:[#allocation2 + $0x48] sm:$0xff]
        %v1033 = vld [vmem:[#allocation2 + $0x50] sm:$0xff]
        %v1034 = vld [vmem:[#allocation2 + $0x58] sm:$0xff]
        %v1035 = vld [vmem:[#allocation2 + $0x60] sm:$0xff]
        %v1036 = vld [vmem:[#allocation2 + $0x68] sm:$0xff]
        %v1037 = vld [vmem:[#allocation2 + $0x70] sm:$0xff]
        %v1038 = vld [vmem:[#allocation2 + $0x78] sm:$0xff]
        %1039 = vmatpush.msra.mxu0 %v1038
        %1040 = vmatpush.msra.mxu0 %v1037
        %1041 = vmatpush.msra.mxu0 %v1036
        %1042 = vmatpush.msra.mxu0 %v1035
        %1043 = vmatpush.msra.mxu0 %v1034
        %1044 = vmatpush.msra.mxu0 %v1033
        %1045 = vmatpush.msra.mxu0 %v1032
        %1046 = vmatpush.msra.mxu0 %v1031
        %1047 = vmatpush.msra.mxu0 %v1030
        %1048 = vmatpush.msra.mxu0 %v1029
        %1049 = vmatpush.msra.mxu0 %v1028
        %1050 = vmatpush.msra.mxu0 %v1027
        %1051 = vmatpush.msra.mxu0 %v1026
        %1052 = vmatpush.msra.mxu0 %v1025
        %1053 = vmatpush.msra.mxu0 %v1024
        %1054 = vmatpush.msra.mxu0 %v1023
        %1055 = vmatmul.f32.gmra.mxu0 %v1007
        %v1056 = vpop.f32.mrf.mxu0
        %v1057 = vadd.f32 0.0, %v1056
        %1058 = vmatmul.f32.gmra.mxu0 %v1008
        %v1059 = vpop.f32.mrf.mxu0
        %v1060 = vadd.f32 0.0, %v1059
        %1061 = vmatmul.f32.gmra.mxu0 %v1009
        %v1062 = vpop.f32.mrf.mxu0
        %v1063 = vadd.f32 0.0, %v1062
        %1064 = vmatmul.f32.gmra.mxu0 %v1010
        %v1065 = vpop.f32.mrf.mxu0
        %v1066 = vadd.f32 0.0, %v1065
        %1067 = vmatmul.f32.gmra.mxu0 %v1011
        %v1068 = vpop.f32.mrf.mxu0
        %v1069 = vadd.f32 0.0, %v1068
        %1070 = vmatmul.f32.gmra.mxu0 %v1012
        %v1071 = vpop.f32.mrf.mxu0
        %v1072 = vadd.f32 0.0, %v1071
        %1073 = vmatmul.f32.gmra.mxu0 %v1013
        %v1074 = vpop.f32.mrf.mxu0
        %v1075 = vadd.f32 0.0, %v1074
        %1076 = vmatmul.f32.gmra.mxu0 %v1014
        %v1077 = vpop.f32.mrf.mxu0
        %v1078 = vadd.f32 0.0, %v1077
        %1079 = vmatmul.f32.gmra.mxu0 %v1015
        %v1080 = vpop.f32.mrf.mxu0
        %v1081 = vadd.f32 0.0, %v1080
        %1082 = vmatmul.f32.gmra.mxu0 %v1016
        %v1083 = vpop.f32.mrf.mxu0
        %v1084 = vadd.f32 0.0, %v1083
        %1085 = vmatmul.f32.gmra.mxu0 %v1017
        %v1086 = vpop.f32.mrf.mxu0
        %v1087 = vadd.f32 0.0, %v1086
        %1088 = vmatmul.f32.gmra.mxu0 %v1018
        %v1089 = vpop.f32.mrf.mxu0
        %v1090 = vadd.f32 0.0, %v1089
        %1091 = vmatmul.f32.gmra.mxu0 %v1019
        %v1092 = vpop.f32.mrf.mxu0
        %v1093 = vadd.f32 0.0, %v1092
        %1094 = vmatmul.f32.gmra.mxu0 %v1020
        %v1095 = vpop.f32.mrf.mxu0
        %v1096 = vadd.f32 0.0, %v1095
        %1097 = vmatmul.f32.gmra.mxu0 %v1021
        %v1098 = vpop.f32.mrf.mxu0
        %v1099 = vadd.f32 0.0, %v1098
        %1100 = vmatmul.f32.gmra.mxu0 %v1022
        %v1101 = vpop.f32.mrf.mxu0
        %v1102 = vadd.f32 0.0, %v1101
        %1103 = vdwg.mxu0
        %s1104 = scalar_lea.vmem [#allocation2], %s321
        %v1105 = vld [vmem:[%s1104] sm:$0xff]
        %v1106 = vld [vmem:[%s1104 + $0x8] sm:$0xff]
        %v1107 = vld [vmem:[%s1104 + $0x10] sm:$0xff]
        %v1108 = vld [vmem:[%s1104 + $0x18] sm:$0xff]
        %v1109 = vld [vmem:[%s1104 + $0x20] sm:$0xff]
        %v1110 = vld [vmem:[%s1104 + $0x28] sm:$0xff]
        %v1111 = vld [vmem:[%s1104 + $0x30] sm:$0xff]
        %v1112 = vld [vmem:[%s1104 + $0x38] sm:$0xff]
        %v1113 = vld [vmem:[%s1104 + $0x40] sm:$0xff]
        %v1114 = vld [vmem:[%s1104 + $0x48] sm:$0xff]
        %v1115 = vld [vmem:[%s1104 + $0x50] sm:$0xff]
        %v1116 = vld [vmem:[%s1104 + $0x58] sm:$0xff]
        %v1117 = vld [vmem:[%s1104 + $0x60] sm:$0xff]
        %v1118 = vld [vmem:[%s1104 + $0x68] sm:$0xff]
        %v1119 = vld [vmem:[%s1104 + $0x70] sm:$0xff]
        %v1120 = vld [vmem:[%s1104 + $0x78] sm:$0xff]
        %v1121 = vld [vmem:[%s5] sm:$0xff]
        %v1122 = vld [vmem:[%s5 + $0x8] sm:$0xff]
        %v1123 = vld [vmem:[%s5 + $0x10] sm:$0xff]
        %v1124 = vld [vmem:[%s5 + $0x18] sm:$0xff]
        %v1125 = vld [vmem:[%s6] sm:$0xff]
        %v1126 = vld [vmem:[%s6 + $0x8] sm:$0xff]
        %v1127 = vld [vmem:[%s6 + $0x10] sm:$0xff]
        %v1128 = vld [vmem:[%s6 + $0x18] sm:$0xff]
        %vm1129 = vcmask 261120
        %v1131 = vsel %vm1129, %v1105, 0
        %v1134 = vsel %vm1129, %v1106, 0
        %v1137 = vsel %vm1129, %v1107, 0
        %v1140 = vsel %vm1129, %v1108, 0
        %v1143 = vsel %vm1129, %v1109, 0
        %v1146 = vsel %vm1129, %v1110, 0
        %v1149 = vsel %vm1129, %v1111, 0
        %v1152 = vsel %vm1129, %v1112, 0
        %v1155 = vsel %vm1129, %v1113, 0
        %v1158 = vsel %vm1129, %v1114, 0
        %v1161 = vsel %vm1129, %v1115, 0
        %v1164 = vsel %vm1129, %v1116, 0
        %v1167 = vsel %vm1129, %v1117, 0
        %v1170 = vsel %vm1129, %v1118, 0
        %v1173 = vsel %vm1129, %v1119, 0
        %v1176 = vsel %vm1129, %v1120, 0
        %1178 = vmatpush.msra.mxu0 0.0
        %1179 = vmatpush.msra.mxu0 0.0
        %1180 = vmatpush.msra.mxu0 0.0
        %1181 = vmatpush.msra.mxu0 0.0
        %1182 = vmatpush.msra.mxu0 0.0
        %1183 = vmatpush.msra.mxu0 0.0
        %1184 = vmatpush.msra.mxu0 0.0
        %1185 = vmatpush.msra.mxu0 0.0
        %1186 = vmatpush.msra.mxu0 0.0
        %1187 = vmatpush.msra.mxu0 0.0
        %1188 = vmatpush.msra.mxu0 0.0
        %1189 = vmatpush.msra.mxu0 0.0
        %1190 = vmatpush.msra.mxu0 %v1128
        %1191 = vmatpush.msra.mxu0 %v1127
        %1192 = vmatpush.msra.mxu0 %v1126
        %1193 = vmatpush.msra.mxu0 %v1125
        %1194 = vmatmul.f32.gmra.mxu0 %v1131
        %v1195 = vpop.f32.mrf.mxu0
        %v1196 = vadd.f32 0.0, %v1195
        %1197 = vmatmul.f32.gmra.mxu0 %v1134
        %v1198 = vpop.f32.mrf.mxu0
        %v1199 = vadd.f32 0.0, %v1198
        %1200 = vmatmul.f32.gmra.mxu0 %v1137
        %v1201 = vpop.f32.mrf.mxu0
        %v1202 = vadd.f32 0.0, %v1201
        %1203 = vmatmul.f32.gmra.mxu0 %v1140
        %v1204 = vpop.f32.mrf.mxu0
        %v1205 = vadd.f32 0.0, %v1204
        %1206 = vmatmul.f32.gmra.mxu0 %v1143
        %v1207 = vpop.f32.mrf.mxu0
        %v1208 = vadd.f32 0.0, %v1207
        %1209 = vmatmul.f32.gmra.mxu0 %v1146
        %v1210 = vpop.f32.mrf.mxu0
        %v1211 = vadd.f32 0.0, %v1210
        %1212 = vmatmul.f32.gmra.mxu0 %v1149
        %v1213 = vpop.f32.mrf.mxu0
        %v1214 = vadd.f32 0.0, %v1213
        %1215 = vmatmul.f32.gmra.mxu0 %v1152
        %v1216 = vpop.f32.mrf.mxu0
        %v1217 = vadd.f32 0.0, %v1216
        %1218 = vmatmul.f32.gmra.mxu0 %v1155
        %v1219 = vpop.f32.mrf.mxu0
        %v1220 = vadd.f32 0.0, %v1219
        %1221 = vmatmul.f32.gmra.mxu0 %v1158
        %v1222 = vpop.f32.mrf.mxu0
        %v1223 = vadd.f32 0.0, %v1222
        %1224 = vmatmul.f32.gmra.mxu0 %v1161
        %v1225 = vpop.f32.mrf.mxu0
        %v1226 = vadd.f32 0.0, %v1225
        %1227 = vmatmul.f32.gmra.mxu0 %v1164
        %v1228 = vpop.f32.mrf.mxu0
        %v1229 = vadd.f32 0.0, %v1228
        %1230 = vmatmul.f32.gmra.mxu0 %v1167
        %v1231 = vpop.f32.mrf.mxu0
        %v1232 = vadd.f32 0.0, %v1231
        %1233 = vmatmul.f32.gmra.mxu0 %v1170
        %v1234 = vpop.f32.mrf.mxu0
        %v1235 = vadd.f32 0.0, %v1234
        %1236 = vmatmul.f32.gmra.mxu0 %v1173
        %v1237 = vpop.f32.mrf.mxu0
        %v1238 = vadd.f32 0.0, %v1237
        %1239 = vmatmul.f32.gmra.mxu0 %v1176
        %v1240 = vpop.f32.mrf.mxu0
        %v1241 = vadd.f32 0.0, %v1240
        %1242 = vdwg.mxu0
        %v1244 = vsel %vm1129, %v1057, 0
        %v1247 = vsel %vm1129, %v1060, 0
        %v1250 = vsel %vm1129, %v1063, 0
        %v1253 = vsel %vm1129, %v1066, 0
        %v1256 = vsel %vm1129, %v1069, 0
        %v1259 = vsel %vm1129, %v1072, 0
        %v1262 = vsel %vm1129, %v1075, 0
        %v1265 = vsel %vm1129, %v1078, 0
        %v1268 = vsel %vm1129, %v1081, 0
        %v1271 = vsel %vm1129, %v1084, 0
        %v1274 = vsel %vm1129, %v1087, 0
        %v1277 = vsel %vm1129, %v1090, 0
        %v1280 = vsel %vm1129, %v1093, 0
        %v1283 = vsel %vm1129, %v1096, 0
        %v1286 = vsel %vm1129, %v1099, 0
        %v1289 = vsel %vm1129, %v1102, 0
        %1291 = vmatpush.msra.mxu0 0.0
        %1292 = vmatpush.msra.mxu0 0.0
        %1293 = vmatpush.msra.mxu0 0.0
        %1294 = vmatpush.msra.mxu0 0.0
        %1295 = vmatpush.msra.mxu0 0.0
        %1296 = vmatpush.msra.mxu0 0.0
        %1297 = vmatpush.msra.mxu0 0.0
        %1298 = vmatpush.msra.mxu0 0.0
        %1299 = vmatpush.msra.mxu0 0.0
        %1300 = vmatpush.msra.mxu0 0.0
        %1301 = vmatpush.msra.mxu0 0.0
        %1302 = vmatpush.msra.mxu0 0.0
        %1303 = vmatpush.msra.mxu0 %v1124
        %1304 = vmatpush.msra.mxu0 %v1123
        %1305 = vmatpush.msra.mxu0 %v1122
        %1306 = vmatpush.msra.mxu0 %v1121
        %1307 = vmatmul.f32.gmra.mxu0 %v1244
        %v1308 = vpop.f32.mrf.mxu0
        %v1309 = vadd.f32 %v1196, %v1308
        %1310 = vmatmul.f32.gmra.mxu0 %v1247
        %v1311 = vpop.f32.mrf.mxu0
        %v1312 = vadd.f32 %v1199, %v1311
        %1313 = vmatmul.f32.gmra.mxu0 %v1250
        %v1314 = vpop.f32.mrf.mxu0
        %v1315 = vadd.f32 %v1202, %v1314
        %1316 = vmatmul.f32.gmra.mxu0 %v1253
        %v1317 = vpop.f32.mrf.mxu0
        %v1318 = vadd.f32 %v1205, %v1317
        %1319 = vmatmul.f32.gmra.mxu0 %v1256
        %v1320 = vpop.f32.mrf.mxu0
        %v1321 = vadd.f32 %v1208, %v1320
        %1322 = vmatmul.f32.gmra.mxu0 %v1259
        %v1323 = vpop.f32.mrf.mxu0
        %v1324 = vadd.f32 %v1211, %v1323
        %1325 = vmatmul.f32.gmra.mxu0 %v1262
        %v1326 = vpop.f32.mrf.mxu0
        %v1327 = vadd.f32 %v1214, %v1326
        %1328 = vmatmul.f32.gmra.mxu0 %v1265
        %v1329 = vpop.f32.mrf.mxu0
        %v1330 = vadd.f32 %v1217, %v1329
        %1331 = vmatmul.f32.gmra.mxu0 %v1268
        %v1332 = vpop.f32.mrf.mxu0
        %v1333 = vadd.f32 %v1220, %v1332
        %1334 = vmatmul.f32.gmra.mxu0 %v1271
        %v1335 = vpop.f32.mrf.mxu0
        %v1336 = vadd.f32 %v1223, %v1335
        %1337 = vmatmul.f32.gmra.mxu0 %v1274
        %v1338 = vpop.f32.mrf.mxu0
        %v1339 = vadd.f32 %v1226, %v1338
        %1340 = vmatmul.f32.gmra.mxu0 %v1277
        %v1341 = vpop.f32.mrf.mxu0
        %v1342 = vadd.f32 %v1229, %v1341
        %1343 = vmatmul.f32.gmra.mxu0 %v1280
        %v1344 = vpop.f32.mrf.mxu0
        %v1345 = vadd.f32 %v1232, %v1344
        %1346 = vmatmul.f32.gmra.mxu0 %v1283
        %v1347 = vpop.f32.mrf.mxu0
        %v1348 = vadd.f32 %v1235, %v1347
        %1349 = vmatmul.f32.gmra.mxu0 %v1286
        %v1350 = vpop.f32.mrf.mxu0
        %v1351 = vadd.f32 %v1238, %v1350
        %1352 = vmatmul.f32.gmra.mxu0 %v1289
        %v1353 = vpop.f32.mrf.mxu0
        %v1354 = vadd.f32 %v1241, %v1353
        %1355 = vdwg.mxu0
        %v1356 = vld [vmem:[%s7] sm:$0x1]
        %v1358 = vperm.slane %v1356, 0
        %v1360 = vadd.f32 %v1309, %v1358
        %v1361 = vadd.f32 %v1312, %v1358
        %v1362 = vadd.f32 %v1315, %v1358
        %v1363 = vadd.f32 %v1318, %v1358
        %v1364 = vadd.f32 %v1321, %v1358
        %v1365 = vadd.f32 %v1324, %v1358
        %v1366 = vadd.f32 %v1327, %v1358
        %v1367 = vadd.f32 %v1330, %v1358
        %v1368 = vadd.f32 %v1333, %v1358
        %v1369 = vadd.f32 %v1336, %v1358
        %v1370 = vadd.f32 %v1339, %v1358
        %v1371 = vadd.f32 %v1342, %v1358
        %v1372 = vadd.f32 %v1345, %v1358
        %v1373 = vadd.f32 %v1348, %v1358
        %v1374 = vadd.f32 %v1351, %v1358
        %v1375 = vadd.f32 %v1354, %v1358
        %v1376 = vmul.f32 %v1360, %v1360
        %v1377 = vmul.f32 %v1361, %v1361
        %v1378 = vmul.f32 %v1362, %v1362
        %v1379 = vmul.f32 %v1363, %v1363
        %v1380 = vmul.f32 %v1364, %v1364
        %v1381 = vmul.f32 %v1365, %v1365
        %v1382 = vmul.f32 %v1366, %v1366
        %v1383 = vmul.f32 %v1367, %v1367
        %v1384 = vmul.f32 %v1368, %v1368
        %v1385 = vmul.f32 %v1369, %v1369
        %v1386 = vmul.f32 %v1370, %v1370
        %v1387 = vmul.f32 %v1371, %v1371
        %v1388 = vmul.f32 %v1372, %v1372
        %v1389 = vmul.f32 %v1373, %v1373
        %v1390 = vmul.f32 %v1374, %v1374
        %v1391 = vmul.f32 %v1375, %v1375
        %vm1392 = vcmask 64512
        %v1393 = vsel %vm1392, %v1376, 0.0
        %1394 = vadd.xlane.f32.xlu0 %v1393
        %v1395 = vpop.xlane.xlu0 %1394
        %v1396 = vsel %vm1392, %v1377, 0.0
        %1397 = vadd.xlane.f32.xlu0 %v1396
        %v1398 = vpop.xlane.xlu0 %1397
        %v1399 = vsel %vm1392, %v1378, 0.0
        %1400 = vadd.xlane.f32.xlu0 %v1399
        %v1401 = vpop.xlane.xlu0 %1400
        %v1402 = vsel %vm1392, %v1379, 0.0
        %1403 = vadd.xlane.f32.xlu0 %v1402
        %v1404 = vpop.xlane.xlu0 %1403
        %v1405 = vsel %vm1392, %v1380, 0.0
        %1406 = vadd.xlane.f32.xlu0 %v1405
        %v1407 = vpop.xlane.xlu0 %1406
        %v1408 = vsel %vm1392, %v1381, 0.0
        %1409 = vadd.xlane.f32.xlu0 %v1408
        %v1410 = vpop.xlane.xlu0 %1409
        %v1411 = vsel %vm1392, %v1382, 0.0
        %1412 = vadd.xlane.f32.xlu0 %v1411
        %v1413 = vpop.xlane.xlu0 %1412
        %v1414 = vsel %vm1392, %v1383, 0.0
        %1415 = vadd.xlane.f32.xlu0 %v1414
        %v1416 = vpop.xlane.xlu0 %1415
        %v1417 = vsel %vm1392, %v1384, 0.0
        %1418 = vadd.xlane.f32.xlu0 %v1417
        %v1419 = vpop.xlane.xlu0 %1418
        %v1420 = vsel %vm1392, %v1385, 0.0
        %1421 = vadd.xlane.f32.xlu0 %v1420
        %v1422 = vpop.xlane.xlu0 %1421
        %v1423 = vsel %vm1392, %v1386, 0.0
        %1424 = vadd.xlane.f32.xlu0 %v1423
        %v1425 = vpop.xlane.xlu0 %1424
        %v1426 = vsel %vm1392, %v1387, 0.0
        %1427 = vadd.xlane.f32.xlu0 %v1426
        %v1428 = vpop.xlane.xlu0 %1427
        %v1429 = vsel %vm1392, %v1388, 0.0
        %1430 = vadd.xlane.f32.xlu0 %v1429
        %v1431 = vpop.xlane.xlu0 %1430
        %v1432 = vsel %vm1392, %v1389, 0.0
        %1433 = vadd.xlane.f32.xlu0 %v1432
        %v1434 = vpop.xlane.xlu0 %1433
        %v1435 = vsel %vm1392, %v1390, 0.0
        %1436 = vadd.xlane.f32.xlu0 %v1435
        %v1437 = vpop.xlane.xlu0 %1436
        %v1438 = vsel %vm1392, %v1391, 0.0
        %1439 = vadd.xlane.f32.xlu0 %v1438
        %v1440 = vpop.xlane.xlu0 %1439
        %v1441 = vmax.f32 %v1395, 1e-24
        %v1442 = vmax.f32 %v1398, 1e-24
        %v1443 = vmax.f32 %v1401, 1e-24
        %v1444 = vmax.f32 %v1404, 1e-24
        %v1445 = vmax.f32 %v1407, 1e-24
        %v1446 = vmax.f32 %v1410, 1e-24
        %v1447 = vmax.f32 %v1413, 1e-24
        %v1448 = vmax.f32 %v1416, 1e-24
        %v1449 = vmax.f32 %v1419, 1e-24
        %v1450 = vmax.f32 %v1422, 1e-24
        %v1451 = vmax.f32 %v1425, 1e-24
        %v1452 = vmax.f32 %v1428, 1e-24
        %v1453 = vmax.f32 %v1431, 1e-24
        %v1454 = vmax.f32 %v1434, 1e-24
        %v1455 = vmax.f32 %v1437, 1e-24
        %v1456 = vmax.f32 %v1440, 1e-24
        %v1457 = vrsqrt.pop %v1441
        %v1458 = vmul.f32 %v1457, %v1441
        %v1459 = vmul.f32 %v1458, %v1457
        %v1460 = vmul.f32 0.5, %v1459
        %v1461 = vsub.f32 1.5, %v1460
        %v1462 = vmul.f32 %v1457, %v1461
        %vm1463 = vweird.f32 %v1441
        %vm1464 = vweird.f32 %v1457
        %vm1465 = vmor %vm1463, %vm1464
        %v1466 = vsel %vm1465, %v1457, %v1462
        %v1467 = vrsqrt.pop %v1442
        %v1468 = vmul.f32 %v1467, %v1442
        %v1469 = vmul.f32 %v1468, %v1467
        %v1470 = vmul.f32 0.5, %v1469
        %v1471 = vsub.f32 1.5, %v1470
        %v1472 = vmul.f32 %v1467, %v1471
        %vm1473 = vweird.f32 %v1442
        %vm1474 = vweird.f32 %v1467
        %vm1475 = vmor %vm1473, %vm1474
        %v1476 = vsel %vm1475, %v1467, %v1472
        %v1477 = vrsqrt.pop %v1443
        %v1478 = vmul.f32 %v1477, %v1443
        %v1479 = vmul.f32 %v1478, %v1477
        %v1480 = vmul.f32 0.5, %v1479
        %v1481 = vsub.f32 1.5, %v1480
        %v1482 = vmul.f32 %v1477, %v1481
        %vm1483 = vweird.f32 %v1443
        %vm1484 = vweird.f32 %v1477
        %vm1485 = vmor %vm1483, %vm1484
        %v1486 = vsel %vm1485, %v1477, %v1482
        %v1487 = vrsqrt.pop %v1444
        %v1488 = vmul.f32 %v1487, %v1444
        %v1489 = vmul.f32 %v1488, %v1487
        %v1490 = vmul.f32 0.5, %v1489
        %v1491 = vsub.f32 1.5, %v1490
        %v1492 = vmul.f32 %v1487, %v1491
        %vm1493 = vweird.f32 %v1444
        %vm1494 = vweird.f32 %v1487
        %vm1495 = vmor %vm1493, %vm1494
        %v1496 = vsel %vm1495, %v1487, %v1492
        %v1497 = vrsqrt.pop %v1445
        %v1498 = vmul.f32 %v1497, %v1445
        %v1499 = vmul.f32 %v1498, %v1497
        %v1500 = vmul.f32 0.5, %v1499
        %v1501 = vsub.f32 1.5, %v1500
        %v1502 = vmul.f32 %v1497, %v1501
        %vm1503 = vweird.f32 %v1445
        %vm1504 = vweird.f32 %v1497
        %vm1505 = vmor %vm1503, %vm1504
        %v1506 = vsel %vm1505, %v1497, %v1502
        %v1507 = vrsqrt.pop %v1446
        %v1508 = vmul.f32 %v1507, %v1446
        %v1509 = vmul.f32 %v1508, %v1507
        %v1510 = vmul.f32 0.5, %v1509
        %v1511 = vsub.f32 1.5, %v1510
        %v1512 = vmul.f32 %v1507, %v1511
        %vm1513 = vweird.f32 %v1446
        %vm1514 = vweird.f32 %v1507
        %vm1515 = vmor %vm1513, %vm1514
        %v1516 = vsel %vm1515, %v1507, %v1512
        %v1517 = vrsqrt.pop %v1447
        %v1518 = vmul.f32 %v1517, %v1447
        %v1519 = vmul.f32 %v1518, %v1517
        %v1520 = vmul.f32 0.5, %v1519
        %v1521 = vsub.f32 1.5, %v1520
        %v1522 = vmul.f32 %v1517, %v1521
        %vm1523 = vweird.f32 %v1447
        %vm1524 = vweird.f32 %v1517
        %vm1525 = vmor %vm1523, %vm1524
        %v1526 = vsel %vm1525, %v1517, %v1522
        %v1527 = vrsqrt.pop %v1448
        %v1528 = vmul.f32 %v1527, %v1448
        %v1529 = vmul.f32 %v1528, %v1527
        %v1530 = vmul.f32 0.5, %v1529
        %v1531 = vsub.f32 1.5, %v1530
        %v1532 = vmul.f32 %v1527, %v1531
        %vm1533 = vweird.f32 %v1448
        %vm1534 = vweird.f32 %v1527
        %vm1535 = vmor %vm1533, %vm1534
        %v1536 = vsel %vm1535, %v1527, %v1532
        %v1537 = vrsqrt.pop %v1449
        %v1538 = vmul.f32 %v1537, %v1449
        %v1539 = vmul.f32 %v1538, %v1537
        %v1540 = vmul.f32 0.5, %v1539
        %v1541 = vsub.f32 1.5, %v1540
        %v1542 = vmul.f32 %v1537, %v1541
        %vm1543 = vweird.f32 %v1449
        %vm1544 = vweird.f32 %v1537
        %vm1545 = vmor %vm1543, %vm1544
        %v1546 = vsel %vm1545, %v1537, %v1542
        %v1547 = vrsqrt.pop %v1450
        %v1548 = vmul.f32 %v1547, %v1450
        %v1549 = vmul.f32 %v1548, %v1547
        %v1550 = vmul.f32 0.5, %v1549
        %v1551 = vsub.f32 1.5, %v1550
        %v1552 = vmul.f32 %v1547, %v1551
        %vm1553 = vweird.f32 %v1450
        %vm1554 = vweird.f32 %v1547
        %vm1555 = vmor %vm1553, %vm1554
        %v1556 = vsel %vm1555, %v1547, %v1552
        %v1557 = vrsqrt.pop %v1451
        %v1558 = vmul.f32 %v1557, %v1451
        %v1559 = vmul.f32 %v1558, %v1557
        %v1560 = vmul.f32 0.5, %v1559
        %v1561 = vsub.f32 1.5, %v1560
        %v1562 = vmul.f32 %v1557, %v1561
        %vm1563 = vweird.f32 %v1451
        %vm1564 = vweird.f32 %v1557
        %vm1565 = vmor %vm1563, %vm1564
        %v1566 = vsel %vm1565, %v1557, %v1562
        %v1567 = vrsqrt.pop %v1452
        %v1568 = vmul.f32 %v1567, %v1452
        %v1569 = vmul.f32 %v1568, %v1567
        %v1570 = vmul.f32 0.5, %v1569
        %v1571 = vsub.f32 1.5, %v1570
        %v1572 = vmul.f32 %v1567, %v1571
        %vm1573 = vweird.f32 %v1452
        %vm1574 = vweird.f32 %v1567
        %vm1575 = vmor %vm1573, %vm1574
        %v1576 = vsel %vm1575, %v1567, %v1572
        %v1577 = vrsqrt.pop %v1453
        %v1578 = vmul.f32 %v1577, %v1453
        %v1579 = vmul.f32 %v1578, %v1577
        %v1580 = vmul.f32 0.5, %v1579
        %v1581 = vsub.f32 1.5, %v1580
        %v1582 = vmul.f32 %v1577, %v1581
        %vm1583 = vweird.f32 %v1453
        %vm1584 = vweird.f32 %v1577
        %vm1585 = vmor %vm1583, %vm1584
        %v1586 = vsel %vm1585, %v1577, %v1582
        %v1587 = vrsqrt.pop %v1454
        %v1588 = vmul.f32 %v1587, %v1454
        %v1589 = vmul.f32 %v1588, %v1587
        %v1590 = vmul.f32 0.5, %v1589
        %v1591 = vsub.f32 1.5, %v1590
        %v1592 = vmul.f32 %v1587, %v1591
        %vm1593 = vweird.f32 %v1454
        %vm1594 = vweird.f32 %v1587
        %vm1595 = vmor %vm1593, %vm1594
        %v1596 = vsel %vm1595, %v1587, %v1592
        %v1597 = vrsqrt.pop %v1455
        %v1598 = vmul.f32 %v1597, %v1455
        %v1599 = vmul.f32 %v1598, %v1597
        %v1600 = vmul.f32 0.5, %v1599
        %v1601 = vsub.f32 1.5, %v1600
        %v1602 = vmul.f32 %v1597, %v1601
        %vm1603 = vweird.f32 %v1455
        %vm1604 = vweird.f32 %v1597
        %vm1605 = vmor %vm1603, %vm1604
        %v1606 = vsel %vm1605, %v1597, %v1602
        %v1607 = vrsqrt.pop %v1456
        %v1608 = vmul.f32 %v1607, %v1456
        %v1609 = vmul.f32 %v1608, %v1607
        %v1610 = vmul.f32 0.5, %v1609
        %v1611 = vsub.f32 1.5, %v1610
        %v1612 = vmul.f32 %v1607, %v1611
        %vm1613 = vweird.f32 %v1456
        %vm1614 = vweird.f32 %v1607
        %vm1615 = vmor %vm1613, %vm1614
        %v1616 = vsel %vm1615, %v1607, %v1612
        %v1617 = vmul.f32 %v1360, %v1466
        %v1618 = vmul.f32 %v1361, %v1476
        %v1619 = vmul.f32 %v1362, %v1486
        %v1620 = vmul.f32 %v1363, %v1496
        %v1621 = vmul.f32 %v1364, %v1506
        %v1622 = vmul.f32 %v1365, %v1516
        %v1623 = vmul.f32 %v1366, %v1526
        %v1624 = vmul.f32 %v1367, %v1536
        %v1625 = vmul.f32 %v1368, %v1546
        %v1626 = vmul.f32 %v1369, %v1556
        %v1627 = vmul.f32 %v1370, %v1566
        %v1628 = vmul.f32 %v1371, %v1576
        %v1629 = vmul.f32 %v1372, %v1586
        %v1630 = vmul.f32 %v1373, %v1596
        %v1631 = vmul.f32 %v1374, %v1606
        %v1632 = vmul.f32 %v1375, %v1616
        %1633 = vst.msk [vmem:[%s319] sm:$0xff] %vm1392, %v1617
        %1634 = vst.msk [vmem:[%s319 + $0x8] sm:$0xff] %vm1392, %v1618
        %1635 = vst.msk [vmem:[%s319 + $0x10] sm:$0xff] %vm1392, %v1619
        %1636 = vst.msk [vmem:[%s319 + $0x18] sm:$0xff] %vm1392, %v1620
        %1637 = vst.msk [vmem:[%s319 + $0x20] sm:$0xff] %vm1392, %v1621
        %1638 = vst.msk [vmem:[%s319 + $0x28] sm:$0xff] %vm1392, %v1622
        %1639 = vst.msk [vmem:[%s319 + $0x30] sm:$0xff] %vm1392, %v1623
        %1640 = vst.msk [vmem:[%s319 + $0x38] sm:$0xff] %vm1392, %v1624
        %1641 = vst.msk [vmem:[%s319 + $0x40] sm:$0xff] %vm1392, %v1625
        %1642 = vst.msk [vmem:[%s319 + $0x48] sm:$0xff] %vm1392, %v1626
        %1643 = vst.msk [vmem:[%s319 + $0x50] sm:$0xff] %vm1392, %v1627
        %1644 = vst.msk [vmem:[%s319 + $0x58] sm:$0xff] %vm1392, %v1628
        %1645 = vst.msk [vmem:[%s319 + $0x60] sm:$0xff] %vm1392, %v1629
        %1646 = vst.msk [vmem:[%s319 + $0x68] sm:$0xff] %vm1392, %v1630
        %1647 = vst.msk [vmem:[%s319 + $0x70] sm:$0xff] %vm1392, %v1631
        %1648 = vst.msk [vmem:[%s319 + $0x78] sm:$0xff] %vm1392, %v1632
      $region60: #{gcn_forward.1} parent=51 // pred_fallthru
        _
      %s1649 = smul.u32 16, %s24
      %p1650 = scmp.lt.s32.totalorder %s1649, 15
      %s1651 = scalar_select %p1650, %s1649, 15
      %s1652 = smul.addr %s1651, 8
      %s1653 = scalar_lea.vmem %s8, %s1652
      // Predicated region
      $region61: #{gcn_forward.1} parent=51 // pred_check
        %p1654 = pneg %p222
      $region62: #{gcn_forward.1} parent=51 // pred_check_branch
        %1656 = sbr.rel (%p1654) target = $region64
      $region63: #{gcn_forward.1} parent=51 // pred_region
        %s1657 = smul.u32 16, %s24
      $region64: #{gcn_forward.1} parent=51 // pred_fallthru
        _
      // Predicated region
      $region65: #{gcn_forward.1} parent=51 // pred_check
        %p1658 = pneg %p222
      $region66: #{gcn_forward.1} parent=51 // pred_check_branch
        %1660 = sbr.rel (%p1658) target = $region68
      $region67: #{gcn_forward.1} parent=51 // pred_region
        %s1661 = smul.u32 16, %s24
        %p1662 = scmp.lt.s32.totalorder %s1661, 15
        %s1663 = scalar_select %p1662, %s1661, 15
        %s1664 = smul.addr %s1663, 8
        %s1665 = scalar_lea.vmem %s8, %s1664
      $region68: #{gcn_forward.1} parent=51 // pred_fallthru
        _
    $region52: #{gcn_forward.1} parent=5 // pred_fallthru
      _
    %p1666 = scmp.le.s32.totalorder 2, %s14
    // Predicated region
    $region69: #{gcn_forward.1} parent=5 // pred_check
      %p1667 = pneg %p1666
    $region70: #{gcn_forward.1} parent=5 // pred_check_branch
      %1669 = sbr.rel (%p1667) target = $region72
    $region71: #{gcn_forward.1} parent=5 // pred_region
      %s1670 = ssub.s32 %s14, 2
    $region72: #{gcn_forward.1} parent=5 // pred_fallthru
      _
  $region6: #{gcn_forward.1} parent=0 // loop_footer
    %s18 = sadd.s32 1, %s14
  $region7: #{gcn_forward.1} parent=0 // loop_footer_branch
    %13 = sbr.rel target = $region3
  $region8: #{gcn_forward.1} parent=0 // loop_exit
    _

</llo_original>
